<compile_context>
chip_gen: v5e
topology: v5e:2x2
jax: 0.10.0
libtpu: 0.0.40
codegen_flags: <defaults>
</compile_context>

<pallas_src>
import jax
import jax.numpy as jnp
import numpy as np
from jax.experimental import pallas as pl
from jax.experimental.pallas import tpu as pltpu

BN_EPS = 1e-5
_LANE = 128
_BIAS_ROWS = 8            # ones-block rows appended to every im2col operand


# ---------------------------------------------------------------------------
# Fused whole-network kernel (single grid step, batch folded into the slab)
# ---------------------------------------------------------------------------
def _make_mbtcn_kernel(b_sz, t_len, seg, halo, w_out, cp, kmax, layer_cfg):
    """args = (x_slab_ref, w_all_ref, [wd_all_ref,] o_ref, tmp_ref)

      x_slab : [CP, W_BUF] f32   batch-folded, halo- and channel-padded input
      w_all  : [2L, CP, KMAX*CP + 8] bf16  per-stage im2col weights (BN+bias folded)
      wd_all : [n_ds, CP, CP + 8] bf16     1x1 downsample weights (+ bias column)
      o_ref  : [CP, W_BUF] f32   output block; doubles as the resident activation slab
      tmp    : [CP, W_BUF] f32   stage-0 output slab (zero halos)
    """
    n_ds = sum(1 for _, has_ds in layer_cfg if has_ds)

    def kernel(*args):
        x_ref, w_ref = args[0], args[1]
        if n_ds:
            wd_ref, o_ref, tmp_ref = args[2], args[3], args[4]
        else:
            wd_ref, o_ref, tmp_ref = None, args[2], args[3]

        # o_ref holds the current block input (and finally the network output)
        # for the whole kernel; tmp_ref holds each block's stage-0 output.
        # Zero halo columns between batch segments provide the "same" conv
        # padding; they are written exactly once here, never per layer.
        o_ref[...] = x_ref[...]
        tmp_ref[...] = jnp.zeros(tmp_ref.shape, tmp_ref.dtype)

        # Feeds the folded bias/BN-shift column of every packed weight.
        ones_blk = jnp.ones((_BIAS_ROWS, w_out), jnp.float32)   # hoisted once

        def conv_stage(buf, w2d, c0, d):
            # im2col: ONE [KMAX*CP + 8, W_OUT] bf16 operand, ONE MXU matmul.
            cols = [buf[:, c0 + m * d:c0 + m * d + w_out] for m in range(kmax)]
            op = jnp.concatenate(cols + [ones_blk], axis=0).astype(jnp.bfloat16)
            acc = jnp.dot(w2d, op, preferred_element_type=jnp.float32)
            return jnp.maximum(acc, 0.0)        # conv + BN + bias + ReLU

        ds_i = 0
        for li, (d, has_ds) in enumerate(layer_cfg):
            c0 = halo - d * (kmax - 1) // 2     # buffer column of tap 0

            # Stage 0 (dropout0 == identity in eval mode); store only the
            # valid columns of each batch segment so the halos stay zero.
            h0 = conv_stage(o_ref, w_ref[2 * li], c0, d)
            for b in range(b_sz):
                lo = b * seg
                tmp_ref[:, lo + halo:lo + halo + t_len] = h0[:, lo:lo + t_len]

            # Stage 1 (dropout1 == identity) reads stage-0 output from VMEM.
            h1 = conv_stage(tmp_ref, w_ref[2 * li + 1], c0, d)

            # Residual branch, computed just before the final add: the block
            # input is still resident in o_ref, so nothing stays live in
            # vregs across the two conv stages.
            if has_ds:
                rop = jnp.concatenate([o_ref[:, halo:halo + w_out], ones_blk],
                                      axis=0).astype(jnp.bfloat16)
                res = jnp.dot(wd_ref[ds_i], rop,
                              preferred_element_type=jnp.float32)
                ds_i += 1
            else:
                res = o_ref[:, halo:halo + w_out]

            out = jnp.maximum(h1 + res, 0.0)    # residual add + final ReLU
            for b in range(b_sz):
                lo = b * seg
                o_ref[:, lo + halo:lo + halo + t_len] = out[:, lo:lo + t_len]

    return kernel


# ---------------------------------------------------------------------------
# Host-side packing + pallas_call wrapper
# ---------------------------------------------------------------------------
def _round_up(v, m):
    return (v + m - 1) // m * m


def mbtcn_forward_pallas(x, params, ksizes):
    b_sz, c_in0, t_len = x.shape
    nk = len(ksizes)
    kmax = max(ksizes)
    # Centre-aligned tap merging is only equivalent to the module's symmetric
    # Chomp1d for odd kernel sizes (pad=(k-1)*d even).
    assert all(k % 2 == 1 for k in ksizes), "kernel sizes must be odd"
    n_layers = len(params)

    halo = (2 ** (n_layers - 1)) * (kmax - 1) // 2        # largest dilated halo
    seg = t_len + 2 * halo                                # per-batch segment width
    w_tot = b_sz * seg
    w_out = w_tot - 2 * halo                              # matmul N dimension
    w_buf = _round_up(w_tot, _LANE)                       # lane-dense slab width

    # Uniform channel padding (multiple of 16: bf16 sublane tile) shared by all
    # layers so every stage's weight packs into one flat operand.
    chan = [c_in0] + [p["stage0"][0]["w"].shape[0] * nk for p in params]
    cp = _round_up(max(chan), 16)
    kcpb = kmax * cp + _BIAS_ROWS

    # ---- fold BN + bias, merge branches, pad, stack (host side, constant) ----
    w_list, wd_list, layer_cfg = [], [], []
    c_prev = c_in0
    for i, p in enumerate(params):
        d = 2 ** i
        cb = p["stage0"][0]["w"].shape[0]
        c_out = cb * nk
        for sname, c_in_s in (("stage0", c_prev), ("stage1", c_out)):
            w_full = np.zeros((kmax, cp, cp), np.float32)
            shift = np.zeros((cp,), np.float32)
            for j, k in enumerate(ksizes):
                bp = p[sname][j]
                scale = np.asarray(bp["gamma"]) / np.sqrt(np.asarray(bp["var"]) + BN_EPS)
                w_eff = np.asarray(bp["w"]) * scale[:, None, None]
                sh = np.asarray(bp["beta"]) + (np.asarray(bp["b"])
                                               - np.asarray(bp["mean"])) * scale
                off = (kmax - k) // 2            # centre-align smaller kernels
                for m in range(k):
                    w_full[off + m, j * cb:(j + 1) * cb, :c_in_s] = w_eff[:, :, m]
                shift[j * cb:(j + 1) * cb] = sh
            w2d = np.zeros((cp, kcpb), np.float32)
            w2d[:, :kmax * cp] = w_full.transpose(1, 0, 2).reshape(cp, kmax * cp)
            w2d[:, kmax * cp] = shift            # bias column (ones-row fold)
            w_list.append(w2d)

        has_ds = "wd" in p                       # module's condition, verbatim
        if has_ds:
            wd = np.zeros((cp, cp + _BIAS_ROWS), np.float32)
            wd[:c_out, :c_prev] = np.asarray(p["wd"])[:, :, 0]
            wd[:c_out, cp] = np.asarray(p["bd"])
            wd_list.append(wd)
        layer_cfg.append((d, has_ds))
        c_prev = c_out
    c_last = c_prev

    w_all = jnp.asarray(np.stack(w_list), dtype=jnp.bfloat16)
    wd_all = (jnp.asarray(np.stack(wd_list), dtype=jnp.bfloat16)
              if wd_list else None)

    # Batch-folded, halo-padded, channel-padded, lane-dense input slab.
    xp = jnp.pad(x.astype(jnp.float32),
                 ((0, 0), (0, cp - c_in0), (halo, halo)))          # [B, CP, SEG]
    x_slab = jnp.transpose(xp, (1, 0, 2)).reshape(cp, w_tot)
    x_slab = jnp.pad(x_slab, ((0, 0), (0, w_buf - w_tot)))

    operands = [x_slab, w_all] + ([wd_all] if wd_all is not None else [])
    in_specs = [pl.BlockSpec(op.shape, (lambda nd: (lambda i: (0,) * nd))(op.ndim))
                for op in operands]

    kernel = _make_mbtcn_kernel(b_sz, t_len, seg, halo, w_out, cp, kmax, layer_cfg)
    slab = pl.pallas_call(
        kernel,
        out_shape=jax.ShapeDtypeStruct((cp, w_buf), jnp.float32),
        grid=(1,),
        in_specs=in_specs,
        out_specs=pl.BlockSpec((cp, w_buf), lambda i: (0, 0)),
        scratch_shapes=[pltpu.VMEM((cp, w_buf), jnp.float32)],
        compiler_params=pltpu.CompilerParams(dimension_semantics=("arbitrary",)),
    )(*operands)

    # Layout plumbing back to [B, C_last, T] (cheap, outside the kernel).
    y = slab[:c_last, :w_tot].reshape(c_last, b_sz, seg)[:, :, halo:halo + t_len]
    return jnp.transpose(y, (1, 0, 2)).astype(x.dtype)


# ---------------------------------------------------------------------------
# Parameter setup (deterministic, synthetic)
# ---------------------------------------------------------------------------
def init_params(key, num_inputs, num_channels, ksizes):
    nk = len(ksizes)
    params = []
    in_ch = num_inputs
    for out_ch in num_channels:
        assert out_ch % nk == 0
        cb = out_ch // nk
        layer = {"stage0": [], "stage1": []}
        for stage_name, c_in_s in (("stage0", in_ch), ("stage1", out_ch)):
            for k in ksizes:
                key, k1, k2, k3, k4, k5, k6 = jax.random.split(key, 7)
                layer[stage_name].append(dict(
                    w=0.1 * jax.random.normal(k1, (cb, c_in_s, k), jnp.float32),
                    b=0.1 * jax.random.normal(k2, (cb,), jnp.float32),
                    gamma=1.0 + 0.1 * jax.random.normal(k3, (cb,), jnp.float32),
                    beta=0.1 * jax.random.normal(k4, (cb,), jnp.float32),
                    mean=0.1 * jax.random.normal(k5, (cb,), jnp.float32),
                    var=jax.random.uniform(k6, (cb,), jnp.float32, 0.5, 1.5),
                ))
        if in_ch // nk != out_ch:    # module's downsample condition, verbatim
            key, k1, k2 = jax.random.split(key, 3)
            layer["wd"] = 0.15 * jax.random.normal(k1, (out_ch, in_ch, 1), jnp.float32)
            layer["bd"] = 0.1 * jax.random.normal(k2, (out_ch,), jnp.float32)
        params.append(layer)
        in_ch = out_ch
    return params


# ---------------------------------------------------------------------------
# Pure-JAX reference (mirrors the PyTorch module in eval mode)
# ---------------------------------------------------------------------------
def mbtcn_forward_ref(x, params, ksizes):
    nk = len(ksizes)
    hi = jax.lax.Precision.HIGHEST

    for i, p in enumerate(params):
        d = 2 ** i

        def cbcr(inp, bp, k, d=d):
            pad = (k - 1) * d
            y = jax.lax.conv_general_dilated(
                inp, bp["w"], (1,), [(pad, pad)], rhs_dilation=(d,),
                dimension_numbers=("NCH", "OIH", "NCH"), precision=hi)
            y = y + bp["b"][None, :, None]
            y = (y - bp["mean"][None, :, None]) \
                / jnp.sqrt(bp["var"][None, :, None] + BN_EPS) \
                * bp["gamma"][None, :, None] + bp["beta"][None, :, None]
            y = y[:, :, pad // 2: y.shape[2] - pad // 2]          # symmetric chomp
            return jax.nn.relu(y)

        out0 = jnp.concatenate([cbcr(x, p["stage0"][j], ksizes[j])
                                for j in range(nk)], axis=1)
        out1 = jnp.concatenate([cbcr(out0, p["stage1"][j], ksizes[j])
                                for j in range(nk)], axis=1)
        if "wd" in p:
            res = jax.lax.conv_general_dilated(
                x, p["wd"], (1,), [(0, 0)],
                dimension_numbers=("NCH", "OIH", "NCH"),
                precision=hi) + p["bd"][None, :, None]
        else:
            res = x
        x = jax.nn.relu(out1 + res)
    return x


# ---------------------------------------------------------------------------
if __name__ == "__main__":
    B, T = 2, 16
    num_inputs = 8
    num_channels = (12, 12, 24)      # dilations 1, 2, 4
    ksizes = (3, 5, 7)               # multibranch: 3 kernel sizes per block

    key = jax.random.PRNGKey(0)
    kx, kp = jax.random.split(key)
    x = jax.random.normal(kx, (B, num_inputs, T), jnp.float32)
    params = init_params(kp, num_inputs, num_channels, ksizes)

    fwd = jax.jit(lambda xx: mbtcn_forward_pallas(xx, params, ksizes))
    out = jax.block_until_ready(fwd(x))

    ref = mbtcn_forward_ref(x, params, ksizes)
    assert out.shape == (B, num_channels[-1], T)
    # bf16 MXU operands (f32 accumulation) -> tolerance loosened accordingly.
    np.testing.assert_allclose(np.asarray(out), np.asarray(ref),
                               rtol=4e-2, atol=4e-2)
    print("KERNEL_OK")
</pallas_src>

<mosaic_0001>
module attributes {stable_mosaic.version = 11 : i64} {
  func.func @kernel(%arg0: i32, %arg1: memref<32x128xf32, #tpu.memory_space<vmem>>, %arg2: memref<6x32x232xbf16, #tpu.memory_space<vmem>>, %arg3: memref<3x32x40xbf16, #tpu.memory_space<vmem>>, %arg4: memref<32x128xf32, #tpu.memory_space<vmem>>, %arg5: memref<32x128xf32, #tpu.memory_space<vmem>>) attributes {dimension_semantics = [#tpu.dimension_semantics<arbitrary>], iteration_bounds = array<i64: 1>, scalar_prefetch = 0 : i64, scratch_operands = 1 : i64, tpu.core_type = #tpu.core_type<tc>, window_params = [{pipeline_mode = #tpu.pipeline_mode<synchronous>, transform_indices = @transform_0, window_bounds = array<i64: 32, 128>}, {pipeline_mode = #tpu.pipeline_mode<synchronous>, transform_indices = @transform_1, window_bounds = array<i64: 6, 32, 232>}, {pipeline_mode = #tpu.pipeline_mode<synchronous>, transform_indices = @transform_2, window_bounds = array<i64: 3, 32, 40>}, {pipeline_mode = #tpu.pipeline_mode<synchronous>, transform_indices = @transform_3, window_bounds = array<i64: 32, 128>}]} {
    %c0 = arith.constant 0 : index
    %c0_0 = arith.constant 0 : index
    %0 = vector.load %arg1[%c0, %c0_0] : memref<32x128xf32, #tpu.memory_space<vmem>>, vector<32x128xf32>
    %c0_1 = arith.constant 0 : index
    %c0_2 = arith.constant 0 : index
    %1 = vector.load %arg4[%c0_1, %c0_2] : memref<32x128xf32, #tpu.memory_space<vmem>>, vector<32x128xf32>
    tpu.vector_store %arg4[%c0_1, %c0_2], %0 {strides = array<i32>} : memref<32x128xf32, #tpu.memory_space<vmem>>, vector<32x128xf32>,
    %cst = arith.constant 0.000000e+00 : f32
    %2 = vector.broadcast %cst : f32 to vector<32x128xf32>
    %c0_3 = arith.constant 0 : index
    %c0_4 = arith.constant 0 : index
    %3 = vector.load %arg5[%c0_3, %c0_4] : memref<32x128xf32, #tpu.memory_space<vmem>>, vector<32x128xf32>
    tpu.vector_store %arg5[%c0_3, %c0_4], %2 {strides = array<i32>} : memref<32x128xf32, #tpu.memory_space<vmem>>, vector<32x128xf32>,
    %cst_5 = arith.constant 1.000000e+00 : f32
    %4 = vector.broadcast %cst_5 : f32 to vector<8x56xf32>
    %c0_6 = arith.constant 0 : index
    %c0_7 = arith.constant 0 : index
    %c0_8 = arith.constant 0 : index
    %5 = vector.load %arg2[%c0_6, %c0_7, %c0_8] : memref<6x32x232xbf16, #tpu.memory_space<vmem>>, vector<1x32x232xbf16>
    %6 = vector.shape_cast %5 : vector<1x32x232xbf16> to vector<32x232xbf16>
    %c0_9 = arith.constant 0 : index
    %c9 = arith.constant 9 : index
    %7 = vector.load %arg4[%c0_9, %c9] : memref<32x128xf32, #tpu.memory_space<vmem>>, vector<32x56xf32>
    %c0_10 = arith.constant 0 : index
    %c10 = arith.constant 10 : index
    %8 = vector.load %arg4[%c0_10, %c10] : memref<32x128xf32, #tpu.memory_space<vmem>>, vector<32x56xf32>
    %c0_11 = arith.constant 0 : index
    %c11 = arith.constant 11 : index
    %9 = vector.load %arg4[%c0_11, %c11] : memref<32x128xf32, #tpu.memory_space<vmem>>, vector<32x56xf32>
    %c0_12 = arith.constant 0 : index
    %c12 = arith.constant 12 : index
    %10 = vector.load %arg4[%c0_12, %c12] : memref<32x128xf32, #tpu.memory_space<vmem>>, vector<32x56xf32>
    %c0_13 = arith.constant 0 : index
    %c13 = arith.constant 13 : index
    %11 = vector.load %arg4[%c0_13, %c13] : memref<32x128xf32, #tpu.memory_space<vmem>>, vector<32x56xf32>
    %c0_14 = arith.constant 0 : index
    %c14 = arith.constant 14 : index
    %12 = vector.load %arg4[%c0_14, %c14] : memref<32x128xf32, #tpu.memory_space<vmem>>, vector<32x56xf32>
    %c0_15 = arith.constant 0 : index
    %c15 = arith.constant 15 : index
    %13 = vector.load %arg4[%c0_15, %c15] : memref<32x128xf32, #tpu.memory_space<vmem>>, vector<32x56xf32>
    %14 = tpu.concatenate %7, %8, %9, %10, %11, %12, %13, %4 in 0 : vector<32x56xf32>, vector<32x56xf32>, vector<32x56xf32>, vector<32x56xf32>, vector<32x56xf32>, vector<32x56xf32>, vector<32x56xf32>, vector<8x56xf32> -> vector<232x56xf32>
    %15 = arith.truncf %14 : vector<232x56xf32> to vector<232x56xbf16>
    %cst_16 = arith.constant dense<0.000000e+00> : vector<32x56xf32>
    %16 = tpu.matmul %6, %15, %cst_16 {dimension_numbers = #tpu.dot_dimension_numbers<[1], [0], [0], [1], [0, 0, 1, 1], [], []>} : vector<32x232xbf16>, vector<232x56xbf16>, vector<32x56xf32> -> vector<32x56xf32>
    %cst_17 = arith.constant 0.000000e+00 : f32
    %17 = vector.broadcast %cst_17 : f32 to vector<32x56xf32>
    %18 = arith.maximumf %16, %17 : vector<32x56xf32>
    %19 = vector.extract_strided_slice %18 {offsets = [0, 0], sizes = [32, 16], strides = [1, 1]} : vector<32x56xf32> to vector<32x16xf32>
    %c0_18 = arith.constant 0 : index
    %c12_19 = arith.constant 12 : index
    %20 = vector.load %arg5[%c0_18, %c12_19] : memref<32x128xf32, #tpu.memory_space<vmem>>, vector<32x16xf32>
    tpu.vector_store %arg5[%c0_18, %c12_19], %19 {strides = array<i32>} : memref<32x128xf32, #tpu.memory_space<vmem>>, vector<32x16xf32>,
    %21 = vector.extract_strided_slice %18 {offsets = [0, 40], sizes = [32, 16], strides = [1, 1]} : vector<32x56xf32> to vector<32x16xf32>
    %c0_20 = arith.constant 0 : index
    %c52 = arith.constant 52 : index
    %22 = vector.load %arg5[%c0_20, %c52] : memref<32x128xf32, #tpu.memory_space<vmem>>, vector<32x16xf32>
    tpu.vector_store %arg5[%c0_20, %c52], %21 {strides = array<i32>} : memref<32x128xf32, #tpu.memory_space<vmem>>, vector<32x16xf32>,
    %c1 = arith.constant 1 : index
    %c0_21 = arith.constant 0 : index
    %c0_22 = arith.constant 0 : index
    %23 = vector.load %arg2[%c1, %c0_21, %c0_22] : memref<6x32x232xbf16, #tpu.memory_space<vmem>>, vector<1x32x232xbf16>
    %24 = vector.shape_cast %23 : vector<1x32x232xbf16> to vector<32x232xbf16>
    %c0_23 = arith.constant 0 : index
    %c9_24 = arith.constant 9 : index
    %25 = vector.load %arg5[%c0_23, %c9_24] : memref<32x128xf32, #tpu.memory_space<vmem>>, vector<32x56xf32>
    %c0_25 = arith.constant 0 : index
    %c10_26 = arith.constant 10 : index
    %26 = vector.load %arg5[%c0_25, %c10_26] : memref<32x128xf32, #tpu.memory_space<vmem>>, vector<32x56xf32>
    %c0_27 = arith.constant 0 : index
    %c11_28 = arith.constant 11 : index
    %27 = vector.load %arg5[%c0_27, %c11_28] : memref<32x128xf32, #tpu.memory_space<vmem>>, vector<32x56xf32>
    %c0_29 = arith.constant 0 : index
    %c12_30 = arith.constant 12 : index
    %28 = vector.load %arg5[%c0_29, %c12_30] : memref<32x128xf32, #tpu.memory_space<vmem>>, vector<32x56xf32>
    %c0_31 = arith.constant 0 : index
    %c13_32 = arith.constant 13 : index
    %29 = vector.load %arg5[%c0_31, %c13_32] : memref<32x128xf32, #tpu.memory_space<vmem>>, vector<32x56xf32>
    %c0_33 = arith.constant 0 : index
    %c14_34 = arith.constant 14 : index
    %30 = vector.load %arg5[%c0_33, %c14_34] : memref<32x128xf32, #tpu.memory_space<vmem>>, vector<32x56xf32>
    %c0_35 = arith.constant 0 : index
    %c15_36 = arith.constant 15 : index
    %31 = vector.load %arg5[%c0_35, %c15_36] : memref<32x128xf32, #tpu.memory_space<vmem>>, vector<32x56xf32>
    %32 = tpu.concatenate %25, %26, %27, %28, %29, %30, %31, %4 in 0 : vector<32x56xf32>, vector<32x56xf32>, vector<32x56xf32>, vector<32x56xf32>, vector<32x56xf32>, vector<32x56xf32>, vector<32x56xf32>, vector<8x56xf32> -> vector<232x56xf32>
    %33 = arith.truncf %32 : vector<232x56xf32> to vector<232x56xbf16>
    %cst_37 = arith.constant dense<0.000000e+00> : vector<32x56xf32>
    %34 = tpu.matmul %24, %33, %cst_37 {dimension_numbers = #tpu.dot_dimension_numbers<[1], [0], [0], [1], [0, 0, 1, 1], [], []>} : vector<32x232xbf16>, vector<232x56xbf16>, vector<32x56xf32> -> vector<32x56xf32>
    %cst_38 = arith.constant 0.000000e+00 : f32
    %35 = vector.broadcast %cst_38 : f32 to vector<32x56xf32>
    %36 = arith.maximumf %34, %35 : vector<32x56xf32>
    %c0_39 = arith.constant 0 : index
    %c12_40 = arith.constant 12 : index
    %37 = vector.load %arg4[%c0_39, %c12_40] : memref<32x128xf32, #tpu.memory_space<vmem>>, vector<32x56xf32>
    %38 = tpu.concatenate %37, %4 in 0 : vector<32x56xf32>, vector<8x56xf32> -> vector<40x56xf32>
    %39 = arith.truncf %38 : vector<40x56xf32> to vector<40x56xbf16>
    %c0_41 = arith.constant 0 : index
    %c0_42 = arith.constant 0 : index
    %c0_43 = arith.constant 0 : index
    %40 = vector.load %arg3[%c0_41, %c0_42, %c0_43] : memref<3x32x40xbf16, #tpu.memory_space<vmem>>, vector<1x32x40xbf16>
    %41 = vector.shape_cast %40 : vector<1x32x40xbf16> to vector<32x40xbf16>
    %cst_44 = arith.constant dense<0.000000e+00> : vector<32x56xf32>
    %42 = tpu.matmul %41, %39, %cst_44 {dimension_numbers = #tpu.dot_dimension_numbers<[1], [0], [0], [1], [0, 0, 1, 1], [], []>} : vector<32x40xbf16>, vector<40x56xbf16>, vector<32x56xf32> -> vector<32x56xf32>
    %43 = arith.addf %36, %42 : vector<32x56xf32>
    %cst_45 = arith.constant 0.000000e+00 : f32
    %44 = vector.broadcast %cst_45 : f32 to vector<32x56xf32>
    %45 = arith.maximumf %43, %44 : vector<32x56xf32>
    %46 = vector.extract_strided_slice %45 {offsets = [0, 0], sizes = [32, 16], strides = [1, 1]} : vector<32x56xf32> to vector<32x16xf32>
    %c0_46 = arith.constant 0 : index
    %c12_47 = arith.constant 12 : index
    %47 = vector.load %arg4[%c0_46, %c12_47] : memref<32x128xf32, #tpu.memory_space<vmem>>, vector<32x16xf32>
    tpu.vector_store %arg4[%c0_46, %c12_47], %46 {strides = array<i32>} : memref<32x128xf32, #tpu.memory_space<vmem>>, vector<32x16xf32>,
    %48 = vector.extract_strided_slice %45 {offsets = [0, 40], sizes = [32, 16], strides = [1, 1]} : vector<32x56xf32> to vector<32x16xf32>
    %c0_48 = arith.constant 0 : index
    %c52_49 = arith.constant 52 : index
    %49 = vector.load %arg4[%c0_48, %c52_49] : memref<32x128xf32, #tpu.memory_space<vmem>>, vector<32x16xf32>
    tpu.vector_store %arg4[%c0_48, %c52_49], %48 {strides = array<i32>} : memref<32x128xf32, #tpu.memory_space<vmem>>, vector<32x16xf32>,
    %c2 = arith.constant 2 : index
    %c0_50 = arith.constant 0 : index
    %c0_51 = arith.constant 0 : index
    %50 = vector.load %arg2[%c2, %c0_50, %c0_51] : memref<6x32x232xbf16, #tpu.memory_space<vmem>>, vector<1x32x232xbf16>
    %51 = vector.shape_cast %50 : vector<1x32x232xbf16> to vector<32x232xbf16>
    %c0_52 = arith.constant 0 : index
    %c6 = arith.constant 6 : index
    %52 = vector.load %arg4[%c0_52, %c6] : memref<32x128xf32, #tpu.memory_space<vmem>>, vector<32x56xf32>
    %c0_53 = arith.constant 0 : index
    %c8 = arith.constant 8 : index
    %53 = vector.load %arg4[%c0_53, %c8] : memref<32x128xf32, #tpu.memory_space<vmem>>, vector<32x56xf32>
    %c0_54 = arith.constant 0 : index
    %c10_55 = arith.constant 10 : index
    %54 = vector.load %arg4[%c0_54, %c10_55] : memref<32x128xf32, #tpu.memory_space<vmem>>, vector<32x56xf32>
    %c0_56 = arith.constant 0 : index
    %c12_57 = arith.constant 12 : index
    %55 = vector.load %arg4[%c0_56, %c12_57] : memref<32x128xf32, #tpu.memory_space<vmem>>, vector<32x56xf32>
    %c0_58 = arith.constant 0 : index
    %c14_59 = arith.constant 14 : index
    %56 = vector.load %arg4[%c0_58, %c14_59] : memref<32x128xf32, #tpu.memory_space<vmem>>, vector<32x56xf32>
    %c0_60 = arith.constant 0 : index
    %c16 = arith.constant 16 : index
    %57 = vector.load %arg4[%c0_60, %c16] : memref<32x128xf32, #tpu.memory_space<vmem>>, vector<32x56xf32>
    %c0_61 = arith.constant 0 : index
    %c18 = arith.constant 18 : index
    %58 = vector.load %arg4[%c0_61, %c18] : memref<32x128xf32, #tpu.memory_space<vmem>>, vector<32x56xf32>
    %59 = tpu.concatenate %52, %53, %54, %55, %56, %57, %58, %4 in 0 : vector<32x56xf32>, vector<32x56xf32>, vector<32x56xf32>, vector<32x56xf32>, vector<32x56xf32>, vector<32x56xf32>, vector<32x56xf32>, vector<8x56xf32> -> vector<232x56xf32>
    %60 = arith.truncf %59 : vector<232x56xf32> to vector<232x56xbf16>
    %cst_62 = arith.constant dense<0.000000e+00> : vector<32x56xf32>
    %61 = tpu.matmul %51, %60, %cst_62 {dimension_numbers = #tpu.dot_dimension_numbers<[1], [0], [0], [1], [0, 0, 1, 1], [], []>} : vector<32x232xbf16>, vector<232x56xbf16>, vector<32x56xf32> -> vector<32x56xf32>
    %cst_63 = arith.constant 0.000000e+00 : f32
    %62 = vector.broadcast %cst_63 : f32 to vector<32x56xf32>
    %63 = arith.maximumf %61, %62 : vector<32x56xf32>
    %64 = vector.extract_strided_slice %63 {offsets = [0, 0], sizes = [32, 16], strides = [1, 1]} : vector<32x56xf32> to vector<32x16xf32>
    %c0_64 = arith.constant 0 : index
    %c12_65 = arith.constant 12 : index
    %65 = vector.load %arg5[%c0_64, %c12_65] : memref<32x128xf32, #tpu.memory_space<vmem>>, vector<32x16xf32>
    tpu.vector_store %arg5[%c0_64, %c12_65], %64 {strides = array<i32>} : memref<32x128xf32, #tpu.memory_space<vmem>>, vector<32x16xf32>,
    %66 = vector.extract_strided_slice %63 {offsets = [0, 40], sizes = [32, 16], strides = [1, 1]} : vector<32x56xf32> to vector<32x16xf32>
    %c0_66 = arith.constant 0 : index
    %c52_67 = arith.constant 52 : index
    %67 = vector.load %arg5[%c0_66, %c52_67] : memref<32x128xf32, #tpu.memory_space<vmem>>, vector<32x16xf32>
    tpu.vector_store %arg5[%c0_66, %c52_67], %66 {strides = array<i32>} : memref<32x128xf32, #tpu.memory_space<vmem>>, vector<32x16xf32>,
    %c3 = arith.constant 3 : index
    %c0_68 = arith.constant 0 : index
    %c0_69 = arith.constant 0 : index
    %68 = vector.load %arg2[%c3, %c0_68, %c0_69] : memref<6x32x232xbf16, #tpu.memory_space<vmem>>, vector<1x32x232xbf16>
    %69 = vector.shape_cast %68 : vector<1x32x232xbf16> to vector<32x232xbf16>
    %c0_70 = arith.constant 0 : index
    %c6_71 = arith.constant 6 : index
    %70 = vector.load %arg5[%c0_70, %c6_71] : memref<32x128xf32, #tpu.memory_space<vmem>>, vector<32x56xf32>
    %c0_72 = arith.constant 0 : index
    %c8_73 = arith.constant 8 : index
    %71 = vector.load %arg5[%c0_72, %c8_73] : memref<32x128xf32, #tpu.memory_space<vmem>>, vector<32x56xf32>
    %c0_74 = arith.constant 0 : index
    %c10_75 = arith.constant 10 : index
    %72 = vector.load %arg5[%c0_74, %c10_75] : memref<32x128xf32, #tpu.memory_space<vmem>>, vector<32x56xf32>
    %c0_76 = arith.constant 0 : index
    %c12_77 = arith.constant 12 : index
    %73 = vector.load %arg5[%c0_76, %c12_77] : memref<32x128xf32, #tpu.memory_space<vmem>>, vector<32x56xf32>
    %c0_78 = arith.constant 0 : index
    %c14_79 = arith.constant 14 : index
    %74 = vector.load %arg5[%c0_78, %c14_79] : memref<32x128xf32, #tpu.memory_space<vmem>>, vector<32x56xf32>
    %c0_80 = arith.constant 0 : index
    %c16_81 = arith.constant 16 : index
    %75 = vector.load %arg5[%c0_80, %c16_81] : memref<32x128xf32, #tpu.memory_space<vmem>>, vector<32x56xf32>
    %c0_82 = arith.constant 0 : index
    %c18_83 = arith.constant 18 : index
    %76 = vector.load %arg5[%c0_82, %c18_83] : memref<32x128xf32, #tpu.memory_space<vmem>>, vector<32x56xf32>
    %77 = tpu.concatenate %70, %71, %72, %73, %74, %75, %76, %4 in 0 : vector<32x56xf32>, vector<32x56xf32>, vector<32x56xf32>, vector<32x56xf32>, vector<32x56xf32>, vector<32x56xf32>, vector<32x56xf32>, vector<8x56xf32> -> vector<232x56xf32>
    %78 = arith.truncf %77 : vector<232x56xf32> to vector<232x56xbf16>
    %cst_84 = arith.constant dense<0.000000e+00> : vector<32x56xf32>
    %79 = tpu.matmul %69, %78, %cst_84 {dimension_numbers = #tpu.dot_dimension_numbers<[1], [0], [0], [1], [0, 0, 1, 1], [], []>} : vector<32x232xbf16>, vector<232x56xbf16>, vector<32x56xf32> -> vector<32x56xf32>
    %cst_85 = arith.constant 0.000000e+00 : f32
    %80 = vector.broadcast %cst_85 : f32 to vector<32x56xf32>
    %81 = arith.maximumf %79, %80 : vector<32x56xf32>
    %c0_86 = arith.constant 0 : index
    %c12_87 = arith.constant 12 : index
    %82 = vector.load %arg4[%c0_86, %c12_87] : memref<32x128xf32, #tpu.memory_space<vmem>>, vector<32x56xf32>
    %83 = tpu.concatenate %82, %4 in 0 : vector<32x56xf32>, vector<8x56xf32> -> vector<40x56xf32>
    %84 = arith.truncf %83 : vector<40x56xf32> to vector<40x56xbf16>
    %c1_88 = arith.constant 1 : index
    %c0_89 = arith.constant 0 : index
    %c0_90 = arith.constant 0 : index
    %85 = vector.load %arg3[%c1_88, %c0_89, %c0_90] : memref<3x32x40xbf16, #tpu.memory_space<vmem>>, vector<1x32x40xbf16>
    %86 = vector.shape_cast %85 : vector<1x32x40xbf16> to vector<32x40xbf16>
    %cst_91 = arith.constant dense<0.000000e+00> : vector<32x56xf32>
    %87 = tpu.matmul %86, %84, %cst_91 {dimension_numbers = #tpu.dot_dimension_numbers<[1], [0], [0], [1], [0, 0, 1, 1], [], []>} : vector<32x40xbf16>, vector<40x56xbf16>, vector<32x56xf32> -> vector<32x56xf32>
    %88 = arith.addf %81, %87 : vector<32x56xf32>
    %cst_92 = arith.constant 0.000000e+00 : f32
    %89 = vector.broadcast %cst_92 : f32 to vector<32x56xf32>
    %90 = arith.maximumf %88, %89 : vector<32x56xf32>
    %91 = vector.extract_strided_slice %90 {offsets = [0, 0], sizes = [32, 16], strides = [1, 1]} : vector<32x56xf32> to vector<32x16xf32>
    %c0_93 = arith.constant 0 : index
    %c12_94 = arith.constant 12 : index
    %92 = vector.load %arg4[%c0_93, %c12_94] : memref<32x128xf32, #tpu.memory_space<vmem>>, vector<32x16xf32>
    tpu.vector_store %arg4[%c0_93, %c12_94], %91 {strides = array<i32>} : memref<32x128xf32, #tpu.memory_space<vmem>>, vector<32x16xf32>,
    %93 = vector.extract_strided_slice %90 {offsets = [0, 40], sizes = [32, 16], strides = [1, 1]} : vector<32x56xf32> to vector<32x16xf32>
    %c0_95 = arith.constant 0 : index
    %c52_96 = arith.constant 52 : index
    %94 = vector.load %arg4[%c0_95, %c52_96] : memref<32x128xf32, #tpu.memory_space<vmem>>, vector<32x16xf32>
    tpu.vector_store %arg4[%c0_95, %c52_96], %93 {strides = array<i32>} : memref<32x128xf32, #tpu.memory_space<vmem>>, vector<32x16xf32>,
    %c4 = arith.constant 4 : index
    %c0_97 = arith.constant 0 : index
    %c0_98 = arith.constant 0 : index
    %95 = vector.load %arg2[%c4, %c0_97, %c0_98] : memref<6x32x232xbf16, #tpu.memory_space<vmem>>, vector<1x32x232xbf16>
    %96 = vector.shape_cast %95 : vector<1x32x232xbf16> to vector<32x232xbf16>
    %c0_99 = arith.constant 0 : index
    %c0_100 = arith.constant 0 : index
    %97 = vector.load %arg4[%c0_99, %c0_100] : memref<32x128xf32, #tpu.memory_space<vmem>>, vector<32x56xf32>
    %c0_101 = arith.constant 0 : index
    %c4_102 = arith.constant 4 : index
    %98 = vector.load %arg4[%c0_101, %c4_102] : memref<32x128xf32, #tpu.memory_space<vmem>>, vector<32x56xf32>
    %c0_103 = arith.constant 0 : index
    %c8_104 = arith.constant 8 : index
    %99 = vector.load %arg4[%c0_103, %c8_104] : memref<32x128xf32, #tpu.memory_space<vmem>>, vector<32x56xf32>
    %c0_105 = arith.constant 0 : index
    %c12_106 = arith.constant 12 : index
    %100 = vector.load %arg4[%c0_105, %c12_106] : memref<32x128xf32, #tpu.memory_space<vmem>>, vector<32x56xf32>
    %c0_107 = arith.constant 0 : index
    %c16_108 = arith.constant 16 : index
    %101 = vector.load %arg4[%c0_107, %c16_108] : memref<32x128xf32, #tpu.memory_space<vmem>>, vector<32x56xf32>
    %c0_109 = arith.constant 0 : index
    %c20 = arith.constant 20 : index
    %102 = vector.load %arg4[%c0_109, %c20] : memref<32x128xf32, #tpu.memory_space<vmem>>, vector<32x56xf32>
    %c0_110 = arith.constant 0 : index
    %c24 = arith.constant 24 : index
    %103 = vector.load %arg4[%c0_110, %c24] : memref<32x128xf32, #tpu.memory_space<vmem>>, vector<32x56xf32>
    %104 = tpu.concatenate %97, %98, %99, %100, %101, %102, %103, %4 in 0 : vector<32x56xf32>, vector<32x56xf32>, vector<32x56xf32>, vector<32x56xf32>, vector<32x56xf32>, vector<32x56xf32>, vector<32x56xf32>, vector<8x56xf32> -> vector<232x56xf32>
    %105 = arith.truncf %104 : vector<232x56xf32> to vector<232x56xbf16>
    %cst_111 = arith.constant dense<0.000000e+00> : vector<32x56xf32>
    %106 = tpu.matmul %96, %105, %cst_111 {dimension_numbers = #tpu.dot_dimension_numbers<[1], [0], [0], [1], [0, 0, 1, 1], [], []>} : vector<32x232xbf16>, vector<232x56xbf16>, vector<32x56xf32> -> vector<32x56xf32>
    %cst_112 = arith.constant 0.000000e+00 : f32
    %107 = vector.broadcast %cst_112 : f32 to vector<32x56xf32>
    %108 = arith.maximumf %106, %107 : vector<32x56xf32>
    %109 = vector.extract_strided_slice %108 {offsets = [0, 0], sizes = [32, 16], strides = [1, 1]} : vector<32x56xf32> to vector<32x16xf32>
    %c0_113 = arith.constant 0 : index
    %c12_114 = arith.constant 12 : index
    %110 = vector.load %arg5[%c0_113, %c12_114] : memref<32x128xf32, #tpu.memory_space<vmem>>, vector<32x16xf32>
    tpu.vector_store %arg5[%c0_113, %c12_114], %109 {strides = array<i32>} : memref<32x128xf32, #tpu.memory_space<vmem>>, vector<32x16xf32>,
    %111 = vector.extract_strided_slice %108 {offsets = [0, 40], sizes = [32, 16], strides = [1, 1]} : vector<32x56xf32> to vector<32x16xf32>
    %c0_115 = arith.constant 0 : index
    %c52_116 = arith.constant 52 : index
    %112 = vector.load %arg5[%c0_115, %c52_116] : memref<32x128xf32, #tpu.memory_space<vmem>>, vector<32x16xf32>
    tpu.vector_store %arg5[%c0_115, %c52_116], %111 {strides = array<i32>} : memref<32x128xf32, #tpu.memory_space<vmem>>, vector<32x16xf32>,
    %c5 = arith.constant 5 : index
    %c0_117 = arith.constant 0 : index
    %c0_118 = arith.constant 0 : index
    %113 = vector.load %arg2[%c5, %c0_117, %c0_118] : memref<6x32x232xbf16, #tpu.memory_space<vmem>>, vector<1x32x232xbf16>
    %114 = vector.shape_cast %113 : vector<1x32x232xbf16> to vector<32x232xbf16>
    %c0_119 = arith.constant 0 : index
    %c0_120 = arith.constant 0 : index
    %115 = vector.load %arg5[%c0_119, %c0_120] : memref<32x128xf32, #tpu.memory_space<vmem>>, vector<32x56xf32>
    %c0_121 = arith.constant 0 : index
    %c4_122 = arith.constant 4 : index
    %116 = vector.load %arg5[%c0_121, %c4_122] : memref<32x128xf32, #tpu.memory_space<vmem>>, vector<32x56xf32>
    %c0_123 = arith.constant 0 : index
    %c8_124 = arith.constant 8 : index
    %117 = vector.load %arg5[%c0_123, %c8_124] : memref<32x128xf32, #tpu.memory_space<vmem>>, vector<32x56xf32>
    %c0_125 = arith.constant 0 : index
    %c12_126 = arith.constant 12 : index
    %118 = vector.load %arg5[%c0_125, %c12_126] : memref<32x128xf32, #tpu.memory_space<vmem>>, vector<32x56xf32>
    %c0_127 = arith.constant 0 : index
    %c16_128 = arith.constant 16 : index
    %119 = vector.load %arg5[%c0_127, %c16_128] : memref<32x128xf32, #tpu.memory_space<vmem>>, vector<32x56xf32>
    %c0_129 = arith.constant 0 : index
    %c20_130 = arith.constant 20 : index
    %120 = vector.load %arg5[%c0_129, %c20_130] : memref<32x128xf32, #tpu.memory_space<vmem>>, vector<32x56xf32>
    %c0_131 = arith.constant 0 : index
    %c24_132 = arith.constant 24 : index
    %121 = vector.load %arg5[%c0_131, %c24_132] : memref<32x128xf32, #tpu.memory_space<vmem>>, vector<32x56xf32>
    %122 = tpu.concatenate %115, %116, %117, %118, %119, %120, %121, %4 in 0 : vector<32x56xf32>, vector<32x56xf32>, vector<32x56xf32>, vector<32x56xf32>, vector<32x56xf32>, vector<32x56xf32>, vector<32x56xf32>, vector<8x56xf32> -> vector<232x56xf32>
    %123 = arith.truncf %122 : vector<232x56xf32> to vector<232x56xbf16>
    %cst_133 = arith.constant dense<0.000000e+00> : vector<32x56xf32>
    %124 = tpu.matmul %114, %123, %cst_133 {dimension_numbers = #tpu.dot_dimension_numbers<[1], [0], [0], [1], [0, 0, 1, 1], [], []>} : vector<32x232xbf16>, vector<232x56xbf16>, vector<32x56xf32> -> vector<32x56xf32>
    %cst_134 = arith.constant 0.000000e+00 : f32
    %125 = vector.broadcast %cst_134 : f32 to vector<32x56xf32>
    %126 = arith.maximumf %124, %125 : vector<32x56xf32>
    %c0_135 = arith.constant 0 : index
    %c12_136 = arith.constant 12 : index
    %127 = vector.load %arg4[%c0_135, %c12_136] : memref<32x128xf32, #tpu.memory_space<vmem>>, vector<32x56xf32>
    %128 = tpu.concatenate %127, %4 in 0 : vector<32x56xf32>, vector<8x56xf32> -> vector<40x56xf32>
    %129 = arith.truncf %128 : vector<40x56xf32> to vector<40x56xbf16>
    %c2_137 = arith.constant 2 : index
    %c0_138 = arith.constant 0 : index
    %c0_139 = arith.constant 0 : index
    %130 = vector.load %arg3[%c2_137, %c0_138, %c0_139] : memref<3x32x40xbf16, #tpu.memory_space<vmem>>, vector<1x32x40xbf16>
    %131 = vector.shape_cast %130 : vector<1x32x40xbf16> to vector<32x40xbf16>
    %cst_140 = arith.constant dense<0.000000e+00> : vector<32x56xf32>
    %132 = tpu.matmul %131, %129, %cst_140 {dimension_numbers = #tpu.dot_dimension_numbers<[1], [0], [0], [1], [0, 0, 1, 1], [], []>} : vector<32x40xbf16>, vector<40x56xbf16>, vector<32x56xf32> -> vector<32x56xf32>
    %133 = arith.addf %126, %132 : vector<32x56xf32>
    %cst_141 = arith.constant 0.000000e+00 : f32
    %134 = vector.broadcast %cst_141 : f32 to vector<32x56xf32>
    %135 = arith.maximumf %133, %134 : vector<32x56xf32>
    %136 = vector.extract_strided_slice %135 {offsets = [0, 0], sizes = [32, 16], strides = [1, 1]} : vector<32x56xf32> to vector<32x16xf32>
    %c0_142 = arith.constant 0 : index
    %c12_143 = arith.constant 12 : index
    %137 = vector.load %arg4[%c0_142, %c12_143] : memref<32x128xf32, #tpu.memory_space<vmem>>, vector<32x16xf32>
    tpu.vector_store %arg4[%c0_142, %c12_143], %136 {strides = array<i32>} : memref<32x128xf32, #tpu.memory_space<vmem>>, vector<32x16xf32>,
    %138 = vector.extract_strided_slice %135 {offsets = [0, 40], sizes = [32, 16], strides = [1, 1]} : vector<32x56xf32> to vector<32x16xf32>
    %c0_144 = arith.constant 0 : index
    %c52_145 = arith.constant 52 : index
    %139 = vector.load %arg4[%c0_144, %c52_145] : memref<32x128xf32, #tpu.memory_space<vmem>>, vector<32x16xf32>
    tpu.vector_store %arg4[%c0_144, %c52_145], %138 {strides = array<i32>} : memref<32x128xf32, #tpu.memory_space<vmem>>, vector<32x16xf32>,
    return
  }
  func.func @transform_0(%arg0: i32) -> (i32, i32) {
    %c0_i32 = arith.constant 0 : i32
    %c0_i32_0 = arith.constant 0 : i32
    %c0_i32_1 = arith.constant 0 : i32
    return %c0_i32, %c0_i32_0 : i32, i32
  }
  func.func @transform_1(%arg0: i32) -> (i32, i32, i32) {
    %c0_i32 = arith.constant 0 : i32
    %c0_i32_0 = arith.constant 0 : i32
    %c0_i32_1 = arith.constant 0 : i32
    %c0_i32_2 = arith.constant 0 : i32
    return %c0_i32, %c0_i32_0, %c0_i32_1 : i32, i32, i32
  }
  func.func @transform_2(%arg0: i32) -> (i32, i32, i32) {
    %c0_i32 = arith.constant 0 : i32
    %c0_i32_0 = arith.constant 0 : i32
    %c0_i32_1 = arith.constant 0 : i32
    %c0_i32_2 = arith.constant 0 : i32
    return %c0_i32, %c0_i32_0, %c0_i32_1 : i32, i32, i32
  }
  func.func @transform_3(%arg0: i32) -> (i32, i32) {
    %c0_i32 = arith.constant 0 : i32
    %c0_i32_0 = arith.constant 0 : i32
    %c0_i32_1 = arith.constant 0 : i32
    return %c0_i32, %c0_i32_0 : i32, i32
  }
}

</mosaic_0001>

<llo_original>
// kernel: _lambda_.1
$region0: #{_lambda_.1}
  #allocation0 [shape = 'u32[]', space=smem, size = 0x4, offset = 0x4, fixed_abs, tag = 'smem constant byte address 0x4 - core index']
  #allocation1 [shape = 'u32[72,128]{1,0:T(1,128)}', space=vmem, size = 0x9000, scoped, tag = 'internal scratch']
  #allocation2 [shape = 'f32[32,128]{1,0:T(8,128)}', space=vmem, size = 0x4000, scoped, tag = 'scratch operand']
  %s0 = inlined_call_operand.vmem [shape: f32[32,128], index: 0, kind: input, shape index: {}]
  %s1 = inlined_call_operand.vmem [shape: bf16[6,32,232], index: 1, kind: input, shape index: {}]
  %s2 = inlined_call_operand.vmem [shape: bf16[3,32,40], index: 2, kind: input, shape index: {}]
  %s3 = inlined_call_operand.vmem [shape: f32[32,128], index: 3, kind: output, shape index: {}]
  %s4 = sld [smem:[#allocation0]]
  $region22: #{_lambda_.1} parent=0
    _
  %s6 = ssub.s32 1, %s4
  %s7 = scalar_select 0, %s6, %s4
  // Predicated region
  $region2: #{_lambda_.1} parent=0 // pred_check
    _
  $region3: #{_lambda_.1} parent=0 // pred_check_branch
    %9 = sbr.rel (0) target = $region5
  $region4: #{_lambda_.1} parent=0 // pred_region
    _
  $region5: #{_lambda_.1} parent=0 // pred_fallthru
    _
  // Predicated region
  $region6: #{_lambda_.1} parent=0 // pred_check
    _
  $region7: #{_lambda_.1} parent=0 // pred_check_branch
    %11 = sbr.rel (0) target = $region9
  $region8: #{_lambda_.1} parent=0 // pred_region
    _
  $region9: #{_lambda_.1} parent=0 // pred_fallthru
    _
  // Predicated region
  $region10: #{_lambda_.1} parent=0 // pred_check
    _
  $region11: #{_lambda_.1} parent=0 // pred_check_branch
    %13 = sbr.rel (0) target = $region13
  $region12: #{_lambda_.1} parent=0 // pred_region
    _
  $region13: #{_lambda_.1} parent=0 // pred_fallthru
    _
  %v15 = vld [vmem:[%s0] sm:$0xff]
  %v16 = vld [vmem:[%s0 + $0x8] sm:$0xff]
  %v17 = vld [vmem:[%s0 + $0x10] sm:$0xff]
  %v18 = vld [vmem:[%s0 + $0x18] sm:$0xff]
  %19 = vst [vmem:[%s3] sm:$0xff] %v15
  %20 = vst [vmem:[%s3 + $0x8] sm:$0xff] %v16
  %21 = vst [vmem:[%s3 + $0x10] sm:$0xff] %v17
  %22 = vst [vmem:[%s3 + $0x18] sm:$0xff] %v18
  %23 = vst [vmem:[#allocation2] sm:$0xff] 0.0
  %24 = vst [vmem:[#allocation2 + $0x8] sm:$0xff] 0.0
  %25 = vst [vmem:[#allocation2 + $0x10] sm:$0xff] 0.0
  %26 = vst [vmem:[#allocation2 + $0x18] sm:$0xff] 0.0
  %v27 = vld [vmem:[%s1] sm:$0xff]
  %v28 = vld [vmem:[%s1 + $0x8] sm:$0xff]
  %v29 = vld [vmem:[%s1 + $0x10] sm:$0xff]
  %v30 = vld [vmem:[%s1 + $0x18] sm:$0xff]
  %v31 = vld [vmem:[%s3] sm:$0xff]
  %v32 = vld [vmem:[%s3 + $0x8] sm:$0xff]
  %v33 = vld [vmem:[%s3 + $0x10] sm:$0xff]
  %v34 = vld [vmem:[%s3 + $0x18] sm:$0xff]
  %39 = vrot.lane.b32.xlu0 %v31, 127
  %v40 = vpop.permute.xlu0 %39
  %41 = vrot.lane.b32.xlu0 %v32, 127
  %v42 = vpop.permute.xlu0 %41
  %43 = vrot.lane.b32.xlu0 %v33, 127
  %v44 = vpop.permute.xlu0 %43
  %45 = vrot.lane.b32.xlu0 %v34, 127
  %v46 = vpop.permute.xlu0 %45
  %51 = vrot.lane.b32.xlu0 %v31, 126
  %v52 = vpop.permute.xlu0 %51
  %53 = vrot.lane.b32.xlu0 %v32, 126
  %v54 = vpop.permute.xlu0 %53
  %55 = vrot.lane.b32.xlu0 %v33, 126
  %v56 = vpop.permute.xlu0 %55
  %57 = vrot.lane.b32.xlu0 %v34, 126
  %v58 = vpop.permute.xlu0 %57
  %63 = vrot.lane.b32.xlu0 %v31, 125
  %v64 = vpop.permute.xlu0 %63
  %65 = vrot.lane.b32.xlu0 %v32, 125
  %v66 = vpop.permute.xlu0 %65
  %67 = vrot.lane.b32.xlu0 %v33, 125
  %v68 = vpop.permute.xlu0 %67
  %69 = vrot.lane.b32.xlu0 %v34, 125
  %v70 = vpop.permute.xlu0 %69
  %75 = vrot.lane.b32.xlu0 %v31, 124
  %v76 = vpop.permute.xlu0 %75
  %77 = vrot.lane.b32.xlu0 %v32, 124
  %v78 = vpop.permute.xlu0 %77
  %79 = vrot.lane.b32.xlu0 %v33, 124
  %v80 = vpop.permute.xlu0 %79
  %81 = vrot.lane.b32.xlu0 %v34, 124
  %v82 = vpop.permute.xlu0 %81
  %87 = vrot.lane.b32.xlu0 %v31, 123
  %v88 = vpop.permute.xlu0 %87
  %89 = vrot.lane.b32.xlu0 %v32, 123
  %v90 = vpop.permute.xlu0 %89
  %91 = vrot.lane.b32.xlu0 %v33, 123
  %v92 = vpop.permute.xlu0 %91
  %93 = vrot.lane.b32.xlu0 %v34, 123
  %v94 = vpop.permute.xlu0 %93
  %99 = vrot.lane.b32.xlu0 %v31, 122
  %v100 = vpop.permute.xlu0 %99
  %101 = vrot.lane.b32.xlu0 %v32, 122
  %v102 = vpop.permute.xlu0 %101
  %103 = vrot.lane.b32.xlu0 %v33, 122
  %v104 = vpop.permute.xlu0 %103
  %105 = vrot.lane.b32.xlu0 %v34, 122
  %v106 = vpop.permute.xlu0 %105
  %v111 = vpack.c.bf16 %v32, %v31
  %v112 = vpack.c.bf16 %v34, %v33
  %v113 = vpack.c.bf16 %v42, %v40
  %v114 = vpack.c.bf16 %v46, %v44
  %v115 = vpack.c.bf16 %v54, %v52
  %v116 = vpack.c.bf16 %v58, %v56
  %v117 = vpack.c.bf16 %v66, %v64
  %v118 = vpack.c.bf16 %v70, %v68
  %v119 = vpack.c.bf16 %v78, %v76
  %v120 = vpack.c.bf16 %v82, %v80
  %v121 = vpack.c.bf16 %v90, %v88
  %v122 = vpack.c.bf16 %v94, %v92
  %v123 = vpack.c.bf16 %v102, %v100
  %v124 = vpack.c.bf16 %v106, %v104
  %v125 = vpack.c.bf16 1.0, 1.0
  %v130 = vunpack.c.l.b16 %v27
  %v131 = vunpack.c.h.b16 %v27
  %v132 = vunpack.c.l.b16 %v28
  %v133 = vunpack.c.h.b16 %v28
  %v134 = vunpack.c.l.b16 %v29
  %v135 = vunpack.c.h.b16 %v29
  %v136 = vunpack.c.l.b16 %v30
  %v137 = vunpack.c.h.b16 %v30
  %v138 = vpack.c.b16 %v132, %v130
  %v139 = vpack.c.b16 %v133, %v131
  %v140 = vpack.c.b16 %v136, %v134
  %v141 = vpack.c.b16 %v137, %v135
  %159 = vrot.lane.b32.xlu0 %v111, 119
  %v160 = vpop.permute.xlu0 %159
  %161 = vrot.lane.b32.xlu0 %v112, 119
  %v162 = vpop.permute.xlu0 %161
  %163 = vrot.lane.b32.xlu0 %v113, 119
  %v164 = vpop.permute.xlu0 %163
  %165 = vrot.lane.b32.xlu0 %v114, 119
  %v166 = vpop.permute.xlu0 %165
  %167 = vrot.lane.b32.xlu0 %v115, 119
  %v168 = vpop.permute.xlu0 %167
  %169 = vrot.lane.b32.xlu0 %v116, 119
  %v170 = vpop.permute.xlu0 %169
  %171 = vrot.lane.b32.xlu0 %v117, 119
  %v172 = vpop.permute.xlu0 %171
  %173 = vrot.lane.b32.xlu0 %v118, 119
  %v174 = vpop.permute.xlu0 %173
  %175 = vrot.lane.b32.xlu0 %v119, 119
  %v176 = vpop.permute.xlu0 %175
  %177 = vrot.lane.b32.xlu0 %v120, 119
  %v178 = vpop.permute.xlu0 %177
  %179 = vrot.lane.b32.xlu0 %v121, 119
  %v180 = vpop.permute.xlu0 %179
  %181 = vrot.lane.b32.xlu0 %v122, 119
  %v182 = vpop.permute.xlu0 %181
  %183 = vrot.lane.b32.xlu0 %v123, 119
  %v184 = vpop.permute.xlu0 %183
  %185 = vrot.lane.b32.xlu0 %v124, 119
  %v186 = vpop.permute.xlu0 %185
  %187 = vrot.lane.b32.xlu0 %v125, 119
  %v188 = vpop.permute.xlu0 %187
  %vm203 = vcmask 850944
  %v205 = vsel %vm203, %v139, 0
  %v208 = vsel %vm203, %v141, 0
  %vm210 = vcmask 1043456
  %v212 = vsel %vm210, %v188, 0
  %214 = vmatpush.bf16.msra.mxu0 %v174
  %215 = vmatpush.bf16.msra.mxu0 %v172
  %216 = vmatpush.bf16.msra.mxu0 %v170
  %217 = vmatpush.bf16.msra.mxu0 %v168
  %218 = vmatpush.bf16.msra.mxu0 %v166
  %219 = vmatpush.bf16.msra.mxu0 %v164
  %220 = vmatpush.bf16.msra.mxu0 %v162
  %221 = vmatpush.bf16.msra.mxu0 %v160
  %222 = vmatmul.bf16.gmra.mxu0 %v138
  %v223 = vpop.f32.mrf.mxu0
  %v224 = vadd.f32 0.0, %v223
  %v225 = vpop.f32.mrf.mxu0
  %v226 = vadd.f32 0.0, %v225
  %227 = vmatmul.bf16.gmra.mxu0 %v140
  %v228 = vpop.f32.mrf.mxu0
  %v229 = vadd.f32 0.0, %v228
  %v230 = vpop.f32.mrf.mxu0
  %v231 = vadd.f32 0.0, %v230
  %232 = vdwg.mxu0
  %233 = vmatpush.bf16.msra.mxu0 0
  %234 = vmatpush.bf16.msra.mxu0 %v212
  %235 = vmatpush.bf16.msra.mxu0 %v186
  %236 = vmatpush.bf16.msra.mxu0 %v184
  %237 = vmatpush.bf16.msra.mxu0 %v182
  %238 = vmatpush.bf16.msra.mxu0 %v180
  %239 = vmatpush.bf16.msra.mxu0 %v178
  %240 = vmatpush.bf16.msra.mxu0 %v176
  %241 = vmatmul.bf16.gmra.mxu0 %v205
  %v242 = vpop.f32.mrf.mxu0
  %v243 = vadd.f32 %v224, %v242
  %v244 = vpop.f32.mrf.mxu0
  %v245 = vadd.f32 %v226, %v244
  %246 = vmatmul.bf16.gmra.mxu0 %v208
  %v247 = vpop.f32.mrf.mxu0
  %v248 = vadd.f32 %v229, %v247
  %v249 = vpop.f32.mrf.mxu0
  %v250 = vadd.f32 %v231, %v249
  %251 = vdwg.mxu0
  %v252 = vmax.f32 %v243, 0.0
  %v253 = vmax.f32 %v245, 0.0
  %v254 = vmax.f32 %v248, 0.0
  %v255 = vmax.f32 %v250, 0.0
  %260 = vrot.lane.b32.xlu0 %v252, 12
  %v261 = vpop.permute.xlu0 %260
  %262 = vrot.lane.b32.xlu0 %v253, 12
  %v263 = vpop.permute.xlu0 %262
  %264 = vrot.lane.b32.xlu0 %v254, 12
  %v265 = vpop.permute.xlu0 %264
  %266 = vrot.lane.b32.xlu0 %v255, 12
  %v267 = vpop.permute.xlu0 %266
  %vm272 = vcmask 228448
  %273 = vst.msk [vmem:[#allocation2] sm:$0xff] %vm272, %v261
  %274 = vst.msk [vmem:[#allocation2 + $0x8] sm:$0xff] %vm272, %v263
  %275 = vst.msk [vmem:[#allocation2 + $0x10] sm:$0xff] %vm272, %v265
  %276 = vst.msk [vmem:[#allocation2 + $0x18] sm:$0xff] %vm272, %v267
  %vm277 = vcmask 556448
  %278 = vst.msk [vmem:[#allocation2] sm:$0xff] %vm277, %v261
  %279 = vst.msk [vmem:[#allocation2 + $0x8] sm:$0xff] %vm277, %v263
  %280 = vst.msk [vmem:[#allocation2 + $0x10] sm:$0xff] %vm277, %v265
  %281 = vst.msk [vmem:[#allocation2 + $0x18] sm:$0xff] %vm277, %v267
  %s282 = scalar_lea.vmem %s1, 32
  %v283 = vld [vmem:[%s282] sm:$0xff]
  %v284 = vld [vmem:[%s282 + $0x8] sm:$0xff]
  %v285 = vld [vmem:[%s282 + $0x10] sm:$0xff]
  %v286 = vld [vmem:[%s282 + $0x18] sm:$0xff]
  %v287 = vld [vmem:[#allocation2] sm:$0xff]
  %v288 = vld [vmem:[#allocation2 + $0x8] sm:$0xff]
  %v289 = vld [vmem:[#allocation2 + $0x10] sm:$0xff]
  %v290 = vld [vmem:[#allocation2 + $0x18] sm:$0xff]
  %295 = vrot.lane.b32.xlu0 %v287, 127
  %v296 = vpop.permute.xlu0 %295
  %297 = vrot.lane.b32.xlu0 %v288, 127
  %v298 = vpop.permute.xlu0 %297
  %299 = vrot.lane.b32.xlu0 %v289, 127
  %v300 = vpop.permute.xlu0 %299
  %301 = vrot.lane.b32.xlu0 %v290, 127
  %v302 = vpop.permute.xlu0 %301
  %307 = vrot.lane.b32.xlu0 %v287, 126
  %v308 = vpop.permute.xlu0 %307
  %309 = vrot.lane.b32.xlu0 %v288, 126
  %v310 = vpop.permute.xlu0 %309
  %311 = vrot.lane.b32.xlu0 %v289, 126
  %v312 = vpop.permute.xlu0 %311
  %313 = vrot.lane.b32.xlu0 %v290, 126
  %v314 = vpop.permute.xlu0 %313
  %319 = vrot.lane.b32.xlu0 %v287, 125
  %v320 = vpop.permute.xlu0 %319
  %321 = vrot.lane.b32.xlu0 %v288, 125
  %v322 = vpop.permute.xlu0 %321
  %323 = vrot.lane.b32.xlu0 %v289, 125
  %v324 = vpop.permute.xlu0 %323
  %325 = vrot.lane.b32.xlu0 %v290, 125
  %v326 = vpop.permute.xlu0 %325
  %331 = vrot.lane.b32.xlu0 %v287, 124
  %v332 = vpop.permute.xlu0 %331
  %333 = vrot.lane.b32.xlu0 %v288, 124
  %v334 = vpop.permute.xlu0 %333
  %335 = vrot.lane.b32.xlu0 %v289, 124
  %v336 = vpop.permute.xlu0 %335
  %337 = vrot.lane.b32.xlu0 %v290, 124
  %v338 = vpop.permute.xlu0 %337
  %343 = vrot.lane.b32.xlu0 %v287, 123
  %v344 = vpop.permute.xlu0 %343
  %345 = vrot.lane.b32.xlu0 %v288, 123
  %v346 = vpop.permute.xlu0 %345
  %347 = vrot.lane.b32.xlu0 %v289, 123
  %v348 = vpop.permute.xlu0 %347
  %349 = vrot.lane.b32.xlu0 %v290, 123
  %v350 = vpop.permute.xlu0 %349
  %355 = vrot.lane.b32.xlu0 %v287, 122
  %v356 = vpop.permute.xlu0 %355
  %357 = vrot.lane.b32.xlu0 %v288, 122
  %v358 = vpop.permute.xlu0 %357
  %359 = vrot.lane.b32.xlu0 %v289, 122
  %v360 = vpop.permute.xlu0 %359
  %361 = vrot.lane.b32.xlu0 %v290, 122
  %v362 = vpop.permute.xlu0 %361
  %v367 = vpack.c.bf16 %v288, %v287
  %v368 = vpack.c.bf16 %v290, %v289
  %v369 = vpack.c.bf16 %v298, %v296
  %v370 = vpack.c.bf16 %v302, %v300
  %v371 = vpack.c.bf16 %v310, %v308
  %v372 = vpack.c.bf16 %v314, %v312
  %v373 = vpack.c.bf16 %v322, %v320
  %v374 = vpack.c.bf16 %v326, %v324
  %v375 = vpack.c.bf16 %v334, %v332
  %v376 = vpack.c.bf16 %v338, %v336
  %v377 = vpack.c.bf16 %v346, %v344
  %v378 = vpack.c.bf16 %v350, %v348
  %v379 = vpack.c.bf16 %v358, %v356
  %v380 = vpack.c.bf16 %v362, %v360
  %v385 = vunpack.c.l.b16 %v283
  %v386 = vunpack.c.h.b16 %v283
  %v387 = vunpack.c.l.b16 %v284
  %v388 = vunpack.c.h.b16 %v284
  %v389 = vunpack.c.l.b16 %v285
  %v390 = vunpack.c.h.b16 %v285
  %v391 = vunpack.c.l.b16 %v286
  %v392 = vunpack.c.h.b16 %v286
  %v393 = vpack.c.b16 %v387, %v385
  %v394 = vpack.c.b16 %v388, %v386
  %v395 = vpack.c.b16 %v391, %v389
  %v396 = vpack.c.b16 %v392, %v390
  %413 = vrot.lane.b32.xlu0 %v367, 119
  %v414 = vpop.permute.xlu0 %413
  %415 = vrot.lane.b32.xlu0 %v368, 119
  %v416 = vpop.permute.xlu0 %415
  %417 = vrot.lane.b32.xlu0 %v369, 119
  %v418 = vpop.permute.xlu0 %417
  %419 = vrot.lane.b32.xlu0 %v370, 119
  %v420 = vpop.permute.xlu0 %419
  %421 = vrot.lane.b32.xlu0 %v371, 119
  %v422 = vpop.permute.xlu0 %421
  %423 = vrot.lane.b32.xlu0 %v372, 119
  %v424 = vpop.permute.xlu0 %423
  %425 = vrot.lane.b32.xlu0 %v373, 119
  %v426 = vpop.permute.xlu0 %425
  %427 = vrot.lane.b32.xlu0 %v374, 119
  %v428 = vpop.permute.xlu0 %427
  %429 = vrot.lane.b32.xlu0 %v375, 119
  %v430 = vpop.permute.xlu0 %429
  %431 = vrot.lane.b32.xlu0 %v376, 119
  %v432 = vpop.permute.xlu0 %431
  %433 = vrot.lane.b32.xlu0 %v377, 119
  %v434 = vpop.permute.xlu0 %433
  %435 = vrot.lane.b32.xlu0 %v378, 119
  %v436 = vpop.permute.xlu0 %435
  %437 = vrot.lane.b32.xlu0 %v379, 119
  %v438 = vpop.permute.xlu0 %437
  %439 = vrot.lane.b32.xlu0 %v380, 119
  %v440 = vpop.permute.xlu0 %439
  %v456 = vsel %vm203, %v394, 0
  %v459 = vsel %vm203, %v396, 0
  %461 = vmatpush.bf16.msra.mxu0 %v428
  %462 = vmatpush.bf16.msra.mxu0 %v426
  %463 = vmatpush.bf16.msra.mxu0 %v424
  %464 = vmatpush.bf16.msra.mxu0 %v422
  %465 = vmatpush.bf16.msra.mxu0 %v420
  %466 = vmatpush.bf16.msra.mxu0 %v418
  %467 = vmatpush.bf16.msra.mxu0 %v416
  %468 = vmatpush.bf16.msra.mxu0 %v414
  %469 = vmatmul.bf16.gmra.mxu0 %v393
  %v470 = vpop.f32.mrf.mxu0
  %v471 = vadd.f32 0.0, %v470
  %v472 = vpop.f32.mrf.mxu0
  %v473 = vadd.f32 0.0, %v472
  %474 = vmatmul.bf16.gmra.mxu0 %v395
  %v475 = vpop.f32.mrf.mxu0
  %v476 = vadd.f32 0.0, %v475
  %v477 = vpop.f32.mrf.mxu0
  %v478 = vadd.f32 0.0, %v477
  %479 = vdwg.mxu0
  %480 = vmatpush.bf16.msra.mxu0 0
  %481 = vmatpush.bf16.msra.mxu0 %v212
  %482 = vmatpush.bf16.msra.mxu0 %v440
  %483 = vmatpush.bf16.msra.mxu0 %v438
  %484 = vmatpush.bf16.msra.mxu0 %v436
  %485 = vmatpush.bf16.msra.mxu0 %v434
  %486 = vmatpush.bf16.msra.mxu0 %v432
  %487 = vmatpush.bf16.msra.mxu0 %v430
  %488 = vmatmul.bf16.gmra.mxu0 %v456
  %v489 = vpop.f32.mrf.mxu0
  %v490 = vadd.f32 %v471, %v489
  %v491 = vpop.f32.mrf.mxu0
  %v492 = vadd.f32 %v473, %v491
  %493 = vmatmul.bf16.gmra.mxu0 %v459
  %v494 = vpop.f32.mrf.mxu0
  %v495 = vadd.f32 %v476, %v494
  %v496 = vpop.f32.mrf.mxu0
  %v497 = vadd.f32 %v478, %v496
  %498 = vdwg.mxu0
  %v499 = vmax.f32 %v490, 0.0
  %v500 = vmax.f32 %v492, 0.0
  %v501 = vmax.f32 %v495, 0.0
  %v502 = vmax.f32 %v497, 0.0
  %v503 = vld [vmem:[%s3] sm:$0xff]
  %v504 = vld [vmem:[%s3 + $0x8] sm:$0xff]
  %v505 = vld [vmem:[%s3 + $0x10] sm:$0xff]
  %v506 = vld [vmem:[%s3 + $0x18] sm:$0xff]
  %v507 = vpack.c.bf16 %v504, %v503
  %v508 = vpack.c.bf16 %v506, %v505
  %v509 = vld [vmem:[%s2] sm:$0xf]
  %v510 = vld [vmem:[%s2 + $0x4] sm:$0xf]
  %v511 = vld [vmem:[%s2 + $0x8] sm:$0xf]
  %v512 = vld [vmem:[%s2 + $0xc] sm:$0xf]
  %v517 = vunpack.c.l.b16 %v509
  %v518 = vunpack.c.l.b16 %v510
  %v519 = vunpack.c.l.b16 %v511
  %v520 = vunpack.c.l.b16 %v512
  %v521 = vpack.c.b16 %v518, %v517
  %v522 = vpack.c.b16 %v520, %v519
  %525 = vrot.lane.b32.xlu0 %v507, 116
  %v526 = vpop.permute.xlu0 %525
  %527 = vrot.lane.b32.xlu0 %v508, 116
  %v528 = vpop.permute.xlu0 %527
  %529 = vrot.lane.b32.xlu0 %v125, 116
  %v530 = vpop.permute.xlu0 %529
  %vm533 = vcmask 326656
  %v535 = vsel %vm533, %v521, 0
  %v538 = vsel %vm533, %v522, 0
  %v541 = vsel %vm210, %v530, 0
  %543 = vmatpush.bf16.msra.mxu0 0
  %544 = vmatpush.bf16.msra.mxu0 0
  %545 = vmatpush.bf16.msra.mxu0 0
  %546 = vmatpush.bf16.msra.mxu0 0
  %547 = vmatpush.bf16.msra.mxu0 0
  %548 = vmatpush.bf16.msra.mxu0 %v541
  %549 = vmatpush.bf16.msra.mxu0 %v528
  %550 = vmatpush.bf16.msra.mxu0 %v526
  %551 = vmatmul.bf16.gmra.mxu0 %v535
  %v552 = vpop.f32.mrf.mxu0
  %v553 = vadd.f32 0.0, %v552
  %v554 = vpop.f32.mrf.mxu0
  %v555 = vadd.f32 0.0, %v554
  %556 = vmatmul.bf16.gmra.mxu0 %v538
  %v557 = vpop.f32.mrf.mxu0
  %v558 = vadd.f32 0.0, %v557
  %v559 = vpop.f32.mrf.mxu0
  %v560 = vadd.f32 0.0, %v559
  %561 = vdwg.mxu0
  %v562 = vadd.f32 %v499, %v553
  %v563 = vadd.f32 %v500, %v555
  %v564 = vadd.f32 %v501, %v558
  %v565 = vadd.f32 %v502, %v560
  %v566 = vmax.f32 %v562, 0.0
  %v567 = vmax.f32 %v563, 0.0
  %v568 = vmax.f32 %v564, 0.0
  %v569 = vmax.f32 %v565, 0.0
  %574 = vrot.lane.b32.xlu0 %v566, 12
  %v575 = vpop.permute.xlu0 %574
  %576 = vrot.lane.b32.xlu0 %v567, 12
  %v577 = vpop.permute.xlu0 %576
  %578 = vrot.lane.b32.xlu0 %v568, 12
  %v579 = vpop.permute.xlu0 %578
  %580 = vrot.lane.b32.xlu0 %v569, 12
  %v581 = vpop.permute.xlu0 %580
  %586 = vst.msk [vmem:[%s3] sm:$0xff] %vm272, %v575
  %587 = vst.msk [vmem:[%s3 + $0x8] sm:$0xff] %vm272, %v577
  %588 = vst.msk [vmem:[%s3 + $0x10] sm:$0xff] %vm272, %v579
  %589 = vst.msk [vmem:[%s3 + $0x18] sm:$0xff] %vm272, %v581
  %590 = vst.msk [vmem:[%s3] sm:$0xff] %vm277, %v575
  %591 = vst.msk [vmem:[%s3 + $0x8] sm:$0xff] %vm277, %v577
  %592 = vst.msk [vmem:[%s3 + $0x10] sm:$0xff] %vm277, %v579
  %593 = vst.msk [vmem:[%s3 + $0x18] sm:$0xff] %vm277, %v581
  %s594 = scalar_lea.vmem %s1, 64
  %v595 = vld [vmem:[%s594] sm:$0xff]
  %v596 = vld [vmem:[%s594 + $0x8] sm:$0xff]
  %v597 = vld [vmem:[%s594 + $0x10] sm:$0xff]
  %v598 = vld [vmem:[%s594 + $0x18] sm:$0xff]
  %v599 = vld [vmem:[%s3] sm:$0xff]
  %v600 = vld [vmem:[%s3 + $0x8] sm:$0xff]
  %v601 = vld [vmem:[%s3 + $0x10] sm:$0xff]
  %v602 = vld [vmem:[%s3 + $0x18] sm:$0xff]
  %607 = vrot.lane.b32.xlu0 %v599, 126
  %v608 = vpop.permute.xlu0 %607
  %609 = vrot.lane.b32.xlu0 %v600, 126
  %v610 = vpop.permute.xlu0 %609
  %611 = vrot.lane.b32.xlu0 %v601, 126
  %v612 = vpop.permute.xlu0 %611
  %613 = vrot.lane.b32.xlu0 %v602, 126
  %v614 = vpop.permute.xlu0 %613
  %619 = vrot.lane.b32.xlu0 %v599, 124
  %v620 = vpop.permute.xlu0 %619
  %621 = vrot.lane.b32.xlu0 %v600, 124
  %v622 = vpop.permute.xlu0 %621
  %623 = vrot.lane.b32.xlu0 %v601, 124
  %v624 = vpop.permute.xlu0 %623
  %625 = vrot.lane.b32.xlu0 %v602, 124
  %v626 = vpop.permute.xlu0 %625
  %631 = vrot.lane.b32.xlu0 %v599, 122
  %v632 = vpop.permute.xlu0 %631
  %633 = vrot.lane.b32.xlu0 %v600, 122
  %v634 = vpop.permute.xlu0 %633
  %635 = vrot.lane.b32.xlu0 %v601, 122
  %v636 = vpop.permute.xlu0 %635
  %637 = vrot.lane.b32.xlu0 %v602, 122
  %v638 = vpop.permute.xlu0 %637
  %643 = vrot.lane.b32.xlu0 %v599, 120
  %v644 = vpop.permute.xlu0 %643
  %645 = vrot.lane.b32.xlu0 %v600, 120
  %v646 = vpop.permute.xlu0 %645
  %647 = vrot.lane.b32.xlu0 %v601, 120
  %v648 = vpop.permute.xlu0 %647
  %649 = vrot.lane.b32.xlu0 %v602, 120
  %v650 = vpop.permute.xlu0 %649
  %655 = vrot.lane.b32.xlu0 %v599, 118
  %v656 = vpop.permute.xlu0 %655
  %657 = vrot.lane.b32.xlu0 %v600, 118
  %v658 = vpop.permute.xlu0 %657
  %659 = vrot.lane.b32.xlu0 %v601, 118
  %v660 = vpop.permute.xlu0 %659
  %661 = vrot.lane.b32.xlu0 %v602, 118
  %v662 = vpop.permute.xlu0 %661
  %667 = vrot.lane.b32.xlu0 %v599, 116
  %v668 = vpop.permute.xlu0 %667
  %669 = vrot.lane.b32.xlu0 %v600, 116
  %v670 = vpop.permute.xlu0 %669
  %671 = vrot.lane.b32.xlu0 %v601, 116
  %v672 = vpop.permute.xlu0 %671
  %673 = vrot.lane.b32.xlu0 %v602, 116
  %v674 = vpop.permute.xlu0 %673
  %v679 = vpack.c.bf16 %v600, %v599
  %v680 = vpack.c.bf16 %v602, %v601
  %v681 = vpack.c.bf16 %v610, %v608
  %v682 = vpack.c.bf16 %v614, %v612
  %v683 = vpack.c.bf16 %v622, %v620
  %v684 = vpack.c.bf16 %v626, %v624
  %v685 = vpack.c.bf16 %v634, %v632
  %v686 = vpack.c.bf16 %v638, %v636
  %v687 = vpack.c.bf16 %v646, %v644
  %v688 = vpack.c.bf16 %v650, %v648
  %v689 = vpack.c.bf16 %v658, %v656
  %v690 = vpack.c.bf16 %v662, %v660
  %v691 = vpack.c.bf16 %v670, %v668
  %v692 = vpack.c.bf16 %v674, %v672
  %v697 = vunpack.c.l.b16 %v595
  %v698 = vunpack.c.h.b16 %v595
  %v699 = vunpack.c.l.b16 %v596
  %v700 = vunpack.c.h.b16 %v596
  %v701 = vunpack.c.l.b16 %v597
  %v702 = vunpack.c.h.b16 %v597
  %v703 = vunpack.c.l.b16 %v598
  %v704 = vunpack.c.h.b16 %v598
  %v705 = vpack.c.b16 %v699, %v697
  %v706 = vpack.c.b16 %v700, %v698
  %v707 = vpack.c.b16 %v703, %v701
  %v708 = vpack.c.b16 %v704, %v702
  %725 = vrot.lane.b32.xlu0 %v679, 122
  %v726 = vpop.permute.xlu0 %725
  %727 = vrot.lane.b32.xlu0 %v680, 122
  %v728 = vpop.permute.xlu0 %727
  %729 = vrot.lane.b32.xlu0 %v681, 122
  %v730 = vpop.permute.xlu0 %729
  %731 = vrot.lane.b32.xlu0 %v682, 122
  %v732 = vpop.permute.xlu0 %731
  %733 = vrot.lane.b32.xlu0 %v683, 122
  %v734 = vpop.permute.xlu0 %733
  %735 = vrot.lane.b32.xlu0 %v684, 122
  %v736 = vpop.permute.xlu0 %735
  %737 = vrot.lane.b32.xlu0 %v685, 122
  %v738 = vpop.permute.xlu0 %737
  %739 = vrot.lane.b32.xlu0 %v686, 122
  %v740 = vpop.permute.xlu0 %739
  %741 = vrot.lane.b32.xlu0 %v687, 122
  %v742 = vpop.permute.xlu0 %741
  %743 = vrot.lane.b32.xlu0 %v688, 122
  %v744 = vpop.permute.xlu0 %743
  %745 = vrot.lane.b32.xlu0 %v689, 122
  %v746 = vpop.permute.xlu0 %745
  %747 = vrot.lane.b32.xlu0 %v690, 122
  %v748 = vpop.permute.xlu0 %747
  %749 = vrot.lane.b32.xlu0 %v691, 122
  %v750 = vpop.permute.xlu0 %749
  %751 = vrot.lane.b32.xlu0 %v692, 122
  %v752 = vpop.permute.xlu0 %751
  %753 = vrot.lane.b32.xlu0 %v125, 122
  %v754 = vpop.permute.xlu0 %753
  %v770 = vsel %vm203, %v706, 0
  %v773 = vsel %vm203, %v708, 0
  %v776 = vsel %vm210, %v754, 0
  %778 = vmatpush.bf16.msra.mxu0 %v740
  %779 = vmatpush.bf16.msra.mxu0 %v738
  %780 = vmatpush.bf16.msra.mxu0 %v736
  %781 = vmatpush.bf16.msra.mxu0 %v734
  %782 = vmatpush.bf16.msra.mxu0 %v732
  %783 = vmatpush.bf16.msra.mxu0 %v730
  %784 = vmatpush.bf16.msra.mxu0 %v728
  %785 = vmatpush.bf16.msra.mxu0 %v726
  %786 = vmatmul.bf16.gmra.mxu0 %v705
  %v787 = vpop.f32.mrf.mxu0
  %v788 = vadd.f32 0.0, %v787
  %v789 = vpop.f32.mrf.mxu0
  %v790 = vadd.f32 0.0, %v789
  %791 = vmatmul.bf16.gmra.mxu0 %v707
  %v792 = vpop.f32.mrf.mxu0
  %v793 = vadd.f32 0.0, %v792
  %v794 = vpop.f32.mrf.mxu0
  %v795 = vadd.f32 0.0, %v794
  %796 = vdwg.mxu0
  %797 = vmatpush.bf16.msra.mxu0 0
  %798 = vmatpush.bf16.msra.mxu0 %v776
  %799 = vmatpush.bf16.msra.mxu0 %v752
  %800 = vmatpush.bf16.msra.mxu0 %v750
  %801 = vmatpush.bf16.msra.mxu0 %v748
  %802 = vmatpush.bf16.msra.mxu0 %v746
  %803 = vmatpush.bf16.msra.mxu0 %v744
  %804 = vmatpush.bf16.msra.mxu0 %v742
  %805 = vmatmul.bf16.gmra.mxu0 %v770
  %v806 = vpop.f32.mrf.mxu0
  %v807 = vadd.f32 %v788, %v806
  %v808 = vpop.f32.mrf.mxu0
  %v809 = vadd.f32 %v790, %v808
  %810 = vmatmul.bf16.gmra.mxu0 %v773
  %v811 = vpop.f32.mrf.mxu0
  %v812 = vadd.f32 %v793, %v811
  %v813 = vpop.f32.mrf.mxu0
  %v814 = vadd.f32 %v795, %v813
  %815 = vdwg.mxu0
  %v816 = vmax.f32 %v807, 0.0
  %v817 = vmax.f32 %v809, 0.0
  %v818 = vmax.f32 %v812, 0.0
  %v819 = vmax.f32 %v814, 0.0
  %824 = vrot.lane.b32.xlu0 %v816, 12
  %v825 = vpop.permute.xlu0 %824
  %826 = vrot.lane.b32.xlu0 %v817, 12
  %v827 = vpop.permute.xlu0 %826
  %828 = vrot.lane.b32.xlu0 %v818, 12
  %v829 = vpop.permute.xlu0 %828
  %830 = vrot.lane.b32.xlu0 %v819, 12
  %v831 = vpop.permute.xlu0 %830
  %836 = vst.msk [vmem:[#allocation2] sm:$0xff] %vm272, %v825
  %837 = vst.msk [vmem:[#allocation2 + $0x8] sm:$0xff] %vm272, %v827
  %838 = vst.msk [vmem:[#allocation2 + $0x10] sm:$0xff] %vm272, %v829
  %839 = vst.msk [vmem:[#allocation2 + $0x18] sm:$0xff] %vm272, %v831
  %840 = vst.msk [vmem:[#allocation2] sm:$0xff] %vm277, %v825
  %841 = vst.msk [vmem:[#allocation2 + $0x8] sm:$0xff] %vm277, %v827
  %842 = vst.msk [vmem:[#allocation2 + $0x10] sm:$0xff] %vm277, %v829
  %843 = vst.msk [vmem:[#allocation2 + $0x18] sm:$0xff] %vm277, %v831
  %s844 = scalar_lea.vmem %s1, 96
  %v845 = vld [vmem:[%s844] sm:$0xff]
  %v846 = vld [vmem:[%s844 + $0x8] sm:$0xff]
  %v847 = vld [vmem:[%s844 + $0x10] sm:$0xff]
  %v848 = vld [vmem:[%s844 + $0x18] sm:$0xff]
  %v849 = vld [vmem:[#allocation2] sm:$0xff]
  %v850 = vld [vmem:[#allocation2 + $0x8] sm:$0xff]
  %v851 = vld [vmem:[#allocation2 + $0x10] sm:$0xff]
  %v852 = vld [vmem:[#allocation2 + $0x18] sm:$0xff]
  %857 = vrot.lane.b32.xlu0 %v849, 126
  %v858 = vpop.permute.xlu0 %857
  %859 = vrot.lane.b32.xlu0 %v850, 126
  %v860 = vpop.permute.xlu0 %859
  %861 = vrot.lane.b32.xlu0 %v851, 126
  %v862 = vpop.permute.xlu0 %861
  %863 = vrot.lane.b32.xlu0 %v852, 126
  %v864 = vpop.permute.xlu0 %863
  %869 = vrot.lane.b32.xlu0 %v849, 124
  %v870 = vpop.permute.xlu0 %869
  %871 = vrot.lane.b32.xlu0 %v850, 124
  %v872 = vpop.permute.xlu0 %871
  %873 = vrot.lane.b32.xlu0 %v851, 124
  %v874 = vpop.permute.xlu0 %873
  %875 = vrot.lane.b32.xlu0 %v852, 124
  %v876 = vpop.permute.xlu0 %875
  %881 = vrot.lane.b32.xlu0 %v849, 122
  %v882 = vpop.permute.xlu0 %881
  %883 = vrot.lane.b32.xlu0 %v850, 122
  %v884 = vpop.permute.xlu0 %883
  %885 = vrot.lane.b32.xlu0 %v851, 122
  %v886 = vpop.permute.xlu0 %885
  %887 = vrot.lane.b32.xlu0 %v852, 122
  %v888 = vpop.permute.xlu0 %887
  %893 = vrot.lane.b32.xlu0 %v849, 120
  %v894 = vpop.permute.xlu0 %893
  %895 = vrot.lane.b32.xlu0 %v850, 120
  %v896 = vpop.permute.xlu0 %895
  %897 = vrot.lane.b32.xlu0 %v851, 120
  %v898 = vpop.permute.xlu0 %897
  %899 = vrot.lane.b32.xlu0 %v852, 120
  %v900 = vpop.permute.xlu0 %899
  %905 = vrot.lane.b32.xlu0 %v849, 118
  %v906 = vpop.permute.xlu0 %905
  %907 = vrot.lane.b32.xlu0 %v850, 118
  %v908 = vpop.permute.xlu0 %907
  %909 = vrot.lane.b32.xlu0 %v851, 118
  %v910 = vpop.permute.xlu0 %909
  %911 = vrot.lane.b32.xlu0 %v852, 118
  %v912 = vpop.permute.xlu0 %911
  %917 = vrot.lane.b32.xlu0 %v849, 116
  %v918 = vpop.permute.xlu0 %917
  %919 = vrot.lane.b32.xlu0 %v850, 116
  %v920 = vpop.permute.xlu0 %919
  %921 = vrot.lane.b32.xlu0 %v851, 116
  %v922 = vpop.permute.xlu0 %921
  %923 = vrot.lane.b32.xlu0 %v852, 116
  %v924 = vpop.permute.xlu0 %923
  %v929 = vpack.c.bf16 %v850, %v849
  %v930 = vpack.c.bf16 %v852, %v851
  %v931 = vpack.c.bf16 %v860, %v858
  %v932 = vpack.c.bf16 %v864, %v862
  %v933 = vpack.c.bf16 %v872, %v870
  %v934 = vpack.c.bf16 %v876, %v874
  %v935 = vpack.c.bf16 %v884, %v882
  %v936 = vpack.c.bf16 %v888, %v886
  %v937 = vpack.c.bf16 %v896, %v894
  %v938 = vpack.c.bf16 %v900, %v898
  %v939 = vpack.c.bf16 %v908, %v906
  %v940 = vpack.c.bf16 %v912, %v910
  %v941 = vpack.c.bf16 %v920, %v918
  %v942 = vpack.c.bf16 %v924, %v922
  %v947 = vunpack.c.l.b16 %v845
  %v948 = vunpack.c.h.b16 %v845
  %v949 = vunpack.c.l.b16 %v846
  %v950 = vunpack.c.h.b16 %v846
  %v951 = vunpack.c.l.b16 %v847
  %v952 = vunpack.c.h.b16 %v847
  %v953 = vunpack.c.l.b16 %v848
  %v954 = vunpack.c.h.b16 %v848
  %v955 = vpack.c.b16 %v949, %v947
  %v956 = vpack.c.b16 %v950, %v948
  %v957 = vpack.c.b16 %v953, %v951
  %v958 = vpack.c.b16 %v954, %v952
  %975 = vrot.lane.b32.xlu0 %v929, 122
  %v976 = vpop.permute.xlu0 %975
  %977 = vrot.lane.b32.xlu0 %v930, 122
  %v978 = vpop.permute.xlu0 %977
  %979 = vrot.lane.b32.xlu0 %v931, 122
  %v980 = vpop.permute.xlu0 %979
  %981 = vrot.lane.b32.xlu0 %v932, 122
  %v982 = vpop.permute.xlu0 %981
  %983 = vrot.lane.b32.xlu0 %v933, 122
  %v984 = vpop.permute.xlu0 %983
  %985 = vrot.lane.b32.xlu0 %v934, 122
  %v986 = vpop.permute.xlu0 %985
  %987 = vrot.lane.b32.xlu0 %v935, 122
  %v988 = vpop.permute.xlu0 %987
  %989 = vrot.lane.b32.xlu0 %v936, 122
  %v990 = vpop.permute.xlu0 %989
  %991 = vrot.lane.b32.xlu0 %v937, 122
  %v992 = vpop.permute.xlu0 %991
  %993 = vrot.lane.b32.xlu0 %v938, 122
  %v994 = vpop.permute.xlu0 %993
  %995 = vrot.lane.b32.xlu0 %v939, 122
  %v996 = vpop.permute.xlu0 %995
  %997 = vrot.lane.b32.xlu0 %v940, 122
  %v998 = vpop.permute.xlu0 %997
  %999 = vrot.lane.b32.xlu0 %v941, 122
  %v1000 = vpop.permute.xlu0 %999
  %1001 = vrot.lane.b32.xlu0 %v942, 122
  %v1002 = vpop.permute.xlu0 %1001
  %v1018 = vsel %vm203, %v956, 0
  %v1021 = vsel %vm203, %v958, 0
  %1023 = vmatpush.bf16.msra.mxu0 %v990
  %1024 = vmatpush.bf16.msra.mxu0 %v988
  %1025 = vmatpush.bf16.msra.mxu0 %v986
  %1026 = vmatpush.bf16.msra.mxu0 %v984
  %1027 = vmatpush.bf16.msra.mxu0 %v982
  %1028 = vmatpush.bf16.msra.mxu0 %v980
  %1029 = vmatpush.bf16.msra.mxu0 %v978
  %1030 = vmatpush.bf16.msra.mxu0 %v976
  %1031 = vmatmul.bf16.gmra.mxu0 %v955
  %v1032 = vpop.f32.mrf.mxu0
  %v1033 = vadd.f32 0.0, %v1032
  %v1034 = vpop.f32.mrf.mxu0
  %v1035 = vadd.f32 0.0, %v1034
  %1036 = vmatmul.bf16.gmra.mxu0 %v957
  %v1037 = vpop.f32.mrf.mxu0
  %v1038 = vadd.f32 0.0, %v1037
  %v1039 = vpop.f32.mrf.mxu0
  %v1040 = vadd.f32 0.0, %v1039
  %1041 = vdwg.mxu0
  %1042 = vmatpush.bf16.msra.mxu0 0
  %1043 = vmatpush.bf16.msra.mxu0 %v776
  %1044 = vmatpush.bf16.msra.mxu0 %v1002
  %1045 = vmatpush.bf16.msra.mxu0 %v1000
  %1046 = vmatpush.bf16.msra.mxu0 %v998
  %1047 = vmatpush.bf16.msra.mxu0 %v996
  %1048 = vmatpush.bf16.msra.mxu0 %v994
  %1049 = vmatpush.bf16.msra.mxu0 %v992
  %1050 = vmatmul.bf16.gmra.mxu0 %v1018
  %v1051 = vpop.f32.mrf.mxu0
  %v1052 = vadd.f32 %v1033, %v1051
  %v1053 = vpop.f32.mrf.mxu0
  %v1054 = vadd.f32 %v1035, %v1053
  %1055 = vmatmul.bf16.gmra.mxu0 %v1021
  %v1056 = vpop.f32.mrf.mxu0
  %v1057 = vadd.f32 %v1038, %v1056
  %v1058 = vpop.f32.mrf.mxu0
  %v1059 = vadd.f32 %v1040, %v1058
  %1060 = vdwg.mxu0
  %v1061 = vmax.f32 %v1052, 0.0
  %v1062 = vmax.f32 %v1054, 0.0
  %v1063 = vmax.f32 %v1057, 0.0
  %v1064 = vmax.f32 %v1059, 0.0
  %v1065 = vld [vmem:[%s3] sm:$0xff]
  %v1066 = vld [vmem:[%s3 + $0x8] sm:$0xff]
  %v1067 = vld [vmem:[%s3 + $0x10] sm:$0xff]
  %v1068 = vld [vmem:[%s3 + $0x18] sm:$0xff]
  %v1069 = vpack.c.bf16 %v1066, %v1065
  %v1070 = vpack.c.bf16 %v1068, %v1067
  %s1071 = scalar_lea.vmem %s2, 16
  %v1072 = vld [vmem:[%s1071] sm:$0xf]
  %v1073 = vld [vmem:[%s1071 + $0x4] sm:$0xf]
  %v1074 = vld [vmem:[%s1071 + $0x8] sm:$0xf]
  %v1075 = vld [vmem:[%s1071 + $0xc] sm:$0xf]
  %v1080 = vunpack.c.l.b16 %v1072
  %v1081 = vunpack.c.l.b16 %v1073
  %v1082 = vunpack.c.l.b16 %v1074
  %v1083 = vunpack.c.l.b16 %v1075
  %v1084 = vpack.c.b16 %v1081, %v1080
  %v1085 = vpack.c.b16 %v1083, %v1082
  %1088 = vrot.lane.b32.xlu0 %v1069, 116
  %v1089 = vpop.permute.xlu0 %1088
  %1090 = vrot.lane.b32.xlu0 %v1070, 116
  %v1091 = vpop.permute.xlu0 %1090
  %v1095 = vsel %vm533, %v1084, 0
  %v1098 = vsel %vm533, %v1085, 0
  %1100 = vmatpush.bf16.msra.mxu0 0
  %1101 = vmatpush.bf16.msra.mxu0 0
  %1102 = vmatpush.bf16.msra.mxu0 0
  %1103 = vmatpush.bf16.msra.mxu0 0
  %1104 = vmatpush.bf16.msra.mxu0 0
  %1105 = vmatpush.bf16.msra.mxu0 %v541
  %1106 = vmatpush.bf16.msra.mxu0 %v1091
  %1107 = vmatpush.bf16.msra.mxu0 %v1089
  %1108 = vmatmul.bf16.gmra.mxu0 %v1095
  %v1109 = vpop.f32.mrf.mxu0
  %v1110 = vadd.f32 0.0, %v1109
  %v1111 = vpop.f32.mrf.mxu0
  %v1112 = vadd.f32 0.0, %v1111
  %1113 = vmatmul.bf16.gmra.mxu0 %v1098
  %v1114 = vpop.f32.mrf.mxu0
  %v1115 = vadd.f32 0.0, %v1114
  %v1116 = vpop.f32.mrf.mxu0
  %v1117 = vadd.f32 0.0, %v1116
  %1118 = vdwg.mxu0
  %v1119 = vadd.f32 %v1061, %v1110
  %v1120 = vadd.f32 %v1062, %v1112
  %v1121 = vadd.f32 %v1063, %v1115
  %v1122 = vadd.f32 %v1064, %v1117
  %v1123 = vmax.f32 %v1119, 0.0
  %v1124 = vmax.f32 %v1120, 0.0
  %v1125 = vmax.f32 %v1121, 0.0
  %v1126 = vmax.f32 %v1122, 0.0
  %1131 = vrot.lane.b32.xlu0 %v1123, 12
  %v1132 = vpop.permute.xlu0 %1131
  %1133 = vrot.lane.b32.xlu0 %v1124, 12
  %v1134 = vpop.permute.xlu0 %1133
  %1135 = vrot.lane.b32.xlu0 %v1125, 12
  %v1136 = vpop.permute.xlu0 %1135
  %1137 = vrot.lane.b32.xlu0 %v1126, 12
  %v1138 = vpop.permute.xlu0 %1137
  %1143 = vst.msk [vmem:[%s3] sm:$0xff] %vm272, %v1132
  %1144 = vst.msk [vmem:[%s3 + $0x8] sm:$0xff] %vm272, %v1134
  %1145 = vst.msk [vmem:[%s3 + $0x10] sm:$0xff] %vm272, %v1136
  %1146 = vst.msk [vmem:[%s3 + $0x18] sm:$0xff] %vm272, %v1138
  %1147 = vst.msk [vmem:[%s3] sm:$0xff] %vm277, %v1132
  %1148 = vst.msk [vmem:[%s3 + $0x8] sm:$0xff] %vm277, %v1134
  %1149 = vst.msk [vmem:[%s3 + $0x10] sm:$0xff] %vm277, %v1136
  %1150 = vst.msk [vmem:[%s3 + $0x18] sm:$0xff] %vm277, %v1138
  %s1151 = scalar_lea.vmem %s1, 128
  %v1152 = vld [vmem:[%s1151] sm:$0xff]
  %v1153 = vld [vmem:[%s1151 + $0x8] sm:$0xff]
  %v1154 = vld [vmem:[%s1151 + $0x10] sm:$0xff]
  %v1155 = vld [vmem:[%s1151 + $0x18] sm:$0xff]
  %v1156 = vld [vmem:[%s3] sm:$0xff]
  %v1157 = vld [vmem:[%s3 + $0x8] sm:$0xff]
  %v1158 = vld [vmem:[%s3 + $0x10] sm:$0xff]
  %v1159 = vld [vmem:[%s3 + $0x18] sm:$0xff]
  %1164 = vrot.lane.b32.xlu0 %v1156, 124
  %v1165 = vpop.permute.xlu0 %1164
  %1166 = vrot.lane.b32.xlu0 %v1157, 124
  %v1167 = vpop.permute.xlu0 %1166
  %1168 = vrot.lane.b32.xlu0 %v1158, 124
  %v1169 = vpop.permute.xlu0 %1168
  %1170 = vrot.lane.b32.xlu0 %v1159, 124
  %v1171 = vpop.permute.xlu0 %1170
  %1176 = vrot.lane.b32.xlu0 %v1156, 120
  %v1177 = vpop.permute.xlu0 %1176
  %1178 = vrot.lane.b32.xlu0 %v1157, 120
  %v1179 = vpop.permute.xlu0 %1178
  %1180 = vrot.lane.b32.xlu0 %v1158, 120
  %v1181 = vpop.permute.xlu0 %1180
  %1182 = vrot.lane.b32.xlu0 %v1159, 120
  %v1183 = vpop.permute.xlu0 %1182
  %1188 = vrot.lane.b32.xlu0 %v1156, 116
  %v1189 = vpop.permute.xlu0 %1188
  %1190 = vrot.lane.b32.xlu0 %v1157, 116
  %v1191 = vpop.permute.xlu0 %1190
  %1192 = vrot.lane.b32.xlu0 %v1158, 116
  %v1193 = vpop.permute.xlu0 %1192
  %1194 = vrot.lane.b32.xlu0 %v1159, 116
  %v1195 = vpop.permute.xlu0 %1194
  %1200 = vrot.lane.b32.xlu0 %v1156, 112
  %v1201 = vpop.permute.xlu0 %1200
  %1202 = vrot.lane.b32.xlu0 %v1157, 112
  %v1203 = vpop.permute.xlu0 %1202
  %1204 = vrot.lane.b32.xlu0 %v1158, 112
  %v1205 = vpop.permute.xlu0 %1204
  %1206 = vrot.lane.b32.xlu0 %v1159, 112
  %v1207 = vpop.permute.xlu0 %1206
  %1212 = vrot.lane.b32.xlu0 %v1156, 108
  %v1213 = vpop.permute.xlu0 %1212
  %1214 = vrot.lane.b32.xlu0 %v1157, 108
  %v1215 = vpop.permute.xlu0 %1214
  %1216 = vrot.lane.b32.xlu0 %v1158, 108
  %v1217 = vpop.permute.xlu0 %1216
  %1218 = vrot.lane.b32.xlu0 %v1159, 108
  %v1219 = vpop.permute.xlu0 %1218
  %1224 = vrot.lane.b32.xlu0 %v1156, 104
  %v1225 = vpop.permute.xlu0 %1224
  %1226 = vrot.lane.b32.xlu0 %v1157, 104
  %v1227 = vpop.permute.xlu0 %1226
  %1228 = vrot.lane.b32.xlu0 %v1158, 104
  %v1229 = vpop.permute.xlu0 %1228
  %1230 = vrot.lane.b32.xlu0 %v1159, 104
  %v1231 = vpop.permute.xlu0 %1230
  %v1236 = vpack.c.bf16 %v1157, %v1156
  %v1237 = vpack.c.bf16 %v1159, %v1158
  %v1238 = vpack.c.bf16 %v1167, %v1165
  %v1239 = vpack.c.bf16 %v1171, %v1169
  %v1240 = vpack.c.bf16 %v1179, %v1177
  %v1241 = vpack.c.bf16 %v1183, %v1181
  %v1242 = vpack.c.bf16 %v1191, %v1189
  %v1243 = vpack.c.bf16 %v1195, %v1193
  %v1244 = vpack.c.bf16 %v1203, %v1201
  %v1245 = vpack.c.bf16 %v1207, %v1205
  %v1246 = vpack.c.bf16 %v1215, %v1213
  %v1247 = vpack.c.bf16 %v1219, %v1217
  %v1248 = vpack.c.bf16 %v1227, %v1225
  %v1249 = vpack.c.bf16 %v1231, %v1229
  %v1254 = vunpack.c.l.b16 %v1152
  %v1255 = vunpack.c.h.b16 %v1152
  %v1256 = vunpack.c.l.b16 %v1153
  %v1257 = vunpack.c.h.b16 %v1153
  %v1258 = vunpack.c.l.b16 %v1154
  %v1259 = vunpack.c.h.b16 %v1154
  %v1260 = vunpack.c.l.b16 %v1155
  %v1261 = vunpack.c.h.b16 %v1155
  %v1262 = vpack.c.b16 %v1256, %v1254
  %v1263 = vpack.c.b16 %v1257, %v1255
  %v1264 = vpack.c.b16 %v1260, %v1258
  %v1265 = vpack.c.b16 %v1261, %v1259
  %v1269 = vsel %vm203, %v1263, 0
  %v1272 = vsel %vm203, %v1265, 0
  %v1275 = vsel %vm210, %v125, 0
  %1277 = vmatpush.bf16.msra.mxu0 %v1243
  %1278 = vmatpush.bf16.msra.mxu0 %v1242
  %1279 = vmatpush.bf16.msra.mxu0 %v1241
  %1280 = vmatpush.bf16.msra.mxu0 %v1240
  %1281 = vmatpush.bf16.msra.mxu0 %v1239
  %1282 = vmatpush.bf16.msra.mxu0 %v1238
  %1283 = vmatpush.bf16.msra.mxu0 %v1237
  %1284 = vmatpush.bf16.msra.mxu0 %v1236
  %1285 = vmatmul.bf16.gmra.mxu0 %v1262
  %v1286 = vpop.f32.mrf.mxu0
  %v1287 = vadd.f32 0.0, %v1286
  %v1288 = vpop.f32.mrf.mxu0
  %v1289 = vadd.f32 0.0, %v1288
  %1290 = vmatmul.bf16.gmra.mxu0 %v1264
  %v1291 = vpop.f32.mrf.mxu0
  %v1292 = vadd.f32 0.0, %v1291
  %v1293 = vpop.f32.mrf.mxu0
  %v1294 = vadd.f32 0.0, %v1293
  %1295 = vdwg.mxu0
  %1296 = vmatpush.bf16.msra.mxu0 0
  %1297 = vmatpush.bf16.msra.mxu0 %v1275
  %1298 = vmatpush.bf16.msra.mxu0 %v1249
  %1299 = vmatpush.bf16.msra.mxu0 %v1248
  %1300 = vmatpush.bf16.msra.mxu0 %v1247
  %1301 = vmatpush.bf16.msra.mxu0 %v1246
  %1302 = vmatpush.bf16.msra.mxu0 %v1245
  %1303 = vmatpush.bf16.msra.mxu0 %v1244
  %1304 = vmatmul.bf16.gmra.mxu0 %v1269
  %v1305 = vpop.f32.mrf.mxu0
  %v1306 = vadd.f32 %v1287, %v1305
  %v1307 = vpop.f32.mrf.mxu0
  %v1308 = vadd.f32 %v1289, %v1307
  %1309 = vmatmul.bf16.gmra.mxu0 %v1272
  %v1310 = vpop.f32.mrf.mxu0
  %v1311 = vadd.f32 %v1292, %v1310
  %v1312 = vpop.f32.mrf.mxu0
  %v1313 = vadd.f32 %v1294, %v1312
  %1314 = vdwg.mxu0
  %v1315 = vmax.f32 %v1306, 0.0
  %v1316 = vmax.f32 %v1308, 0.0
  %v1317 = vmax.f32 %v1311, 0.0
  %v1318 = vmax.f32 %v1313, 0.0
  %1323 = vrot.lane.b32.xlu0 %v1315, 12
  %v1324 = vpop.permute.xlu0 %1323
  %1325 = vrot.lane.b32.xlu0 %v1316, 12
  %v1326 = vpop.permute.xlu0 %1325
  %1327 = vrot.lane.b32.xlu0 %v1317, 12
  %v1328 = vpop.permute.xlu0 %1327
  %1329 = vrot.lane.b32.xlu0 %v1318, 12
  %v1330 = vpop.permute.xlu0 %1329
  %1335 = vst.msk [vmem:[#allocation2] sm:$0xff] %vm272, %v1324
  %1336 = vst.msk [vmem:[#allocation2 + $0x8] sm:$0xff] %vm272, %v1326
  %1337 = vst.msk [vmem:[#allocation2 + $0x10] sm:$0xff] %vm272, %v1328
  %1338 = vst.msk [vmem:[#allocation2 + $0x18] sm:$0xff] %vm272, %v1330
  %1339 = vst.msk [vmem:[#allocation2] sm:$0xff] %vm277, %v1324
  %1340 = vst.msk [vmem:[#allocation2 + $0x8] sm:$0xff] %vm277, %v1326
  %1341 = vst.msk [vmem:[#allocation2 + $0x10] sm:$0xff] %vm277, %v1328
  %1342 = vst.msk [vmem:[#allocation2 + $0x18] sm:$0xff] %vm277, %v1330
  %s1343 = scalar_lea.vmem %s1, 160
  %v1344 = vld [vmem:[%s1343] sm:$0xff]
  %v1345 = vld [vmem:[%s1343 + $0x8] sm:$0xff]
  %v1346 = vld [vmem:[%s1343 + $0x10] sm:$0xff]
  %v1347 = vld [vmem:[%s1343 + $0x18] sm:$0xff]
  %v1348 = vld [vmem:[#allocation2] sm:$0xff]
  %v1349 = vld [vmem:[#allocation2 + $0x8] sm:$0xff]
  %v1350 = vld [vmem:[#allocation2 + $0x10] sm:$0xff]
  %v1351 = vld [vmem:[#allocation2 + $0x18] sm:$0xff]
  %1356 = vrot.lane.b32.xlu0 %v1348, 124
  %v1357 = vpop.permute.xlu0 %1356
  %1358 = vrot.lane.b32.xlu0 %v1349, 124
  %v1359 = vpop.permute.xlu0 %1358
  %1360 = vrot.lane.b32.xlu0 %v1350, 124
  %v1361 = vpop.permute.xlu0 %1360
  %1362 = vrot.lane.b32.xlu0 %v1351, 124
  %v1363 = vpop.permute.xlu0 %1362
  %1368 = vrot.lane.b32.xlu0 %v1348, 120
  %v1369 = vpop.permute.xlu0 %1368
  %1370 = vrot.lane.b32.xlu0 %v1349, 120
  %v1371 = vpop.permute.xlu0 %1370
  %1372 = vrot.lane.b32.xlu0 %v1350, 120
  %v1373 = vpop.permute.xlu0 %1372
  %1374 = vrot.lane.b32.xlu0 %v1351, 120
  %v1375 = vpop.permute.xlu0 %1374
  %1380 = vrot.lane.b32.xlu0 %v1348, 116
  %v1381 = vpop.permute.xlu0 %1380
  %1382 = vrot.lane.b32.xlu0 %v1349, 116
  %v1383 = vpop.permute.xlu0 %1382
  %1384 = vrot.lane.b32.xlu0 %v1350, 116
  %v1385 = vpop.permute.xlu0 %1384
  %1386 = vrot.lane.b32.xlu0 %v1351, 116
  %v1387 = vpop.permute.xlu0 %1386
  %1392 = vrot.lane.b32.xlu0 %v1348, 112
  %v1393 = vpop.permute.xlu0 %1392
  %1394 = vrot.lane.b32.xlu0 %v1349, 112
  %v1395 = vpop.permute.xlu0 %1394
  %1396 = vrot.lane.b32.xlu0 %v1350, 112
  %v1397 = vpop.permute.xlu0 %1396
  %1398 = vrot.lane.b32.xlu0 %v1351, 112
  %v1399 = vpop.permute.xlu0 %1398
  %1404 = vrot.lane.b32.xlu0 %v1348, 108
  %v1405 = vpop.permute.xlu0 %1404
  %1406 = vrot.lane.b32.xlu0 %v1349, 108
  %v1407 = vpop.permute.xlu0 %1406
  %1408 = vrot.lane.b32.xlu0 %v1350, 108
  %v1409 = vpop.permute.xlu0 %1408
  %1410 = vrot.lane.b32.xlu0 %v1351, 108
  %v1411 = vpop.permute.xlu0 %1410
  %1416 = vrot.lane.b32.xlu0 %v1348, 104
  %v1417 = vpop.permute.xlu0 %1416
  %1418 = vrot.lane.b32.xlu0 %v1349, 104
  %v1419 = vpop.permute.xlu0 %1418
  %1420 = vrot.lane.b32.xlu0 %v1350, 104
  %v1421 = vpop.permute.xlu0 %1420
  %1422 = vrot.lane.b32.xlu0 %v1351, 104
  %v1423 = vpop.permute.xlu0 %1422
  %v1428 = vpack.c.bf16 %v1349, %v1348
  %v1429 = vpack.c.bf16 %v1351, %v1350
  %v1430 = vpack.c.bf16 %v1359, %v1357
  %v1431 = vpack.c.bf16 %v1363, %v1361
  %v1432 = vpack.c.bf16 %v1371, %v1369
  %v1433 = vpack.c.bf16 %v1375, %v1373
  %v1434 = vpack.c.bf16 %v1383, %v1381
  %v1435 = vpack.c.bf16 %v1387, %v1385
  %v1436 = vpack.c.bf16 %v1395, %v1393
  %v1437 = vpack.c.bf16 %v1399, %v1397
  %v1438 = vpack.c.bf16 %v1407, %v1405
  %v1439 = vpack.c.bf16 %v1411, %v1409
  %v1440 = vpack.c.bf16 %v1419, %v1417
  %v1441 = vpack.c.bf16 %v1423, %v1421
  %v1446 = vunpack.c.l.b16 %v1344
  %v1447 = vunpack.c.h.b16 %v1344
  %v1448 = vunpack.c.l.b16 %v1345
  %v1449 = vunpack.c.h.b16 %v1345
  %v1450 = vunpack.c.l.b16 %v1346
  %v1451 = vunpack.c.h.b16 %v1346
  %v1452 = vunpack.c.l.b16 %v1347
  %v1453 = vunpack.c.h.b16 %v1347
  %v1454 = vpack.c.b16 %v1448, %v1446
  %v1455 = vpack.c.b16 %v1449, %v1447
  %v1456 = vpack.c.b16 %v1452, %v1450
  %v1457 = vpack.c.b16 %v1453, %v1451
  %v1461 = vsel %vm203, %v1455, 0
  %v1464 = vsel %vm203, %v1457, 0
  %1466 = vmatpush.bf16.msra.mxu0 %v1435
  %1467 = vmatpush.bf16.msra.mxu0 %v1434
  %1468 = vmatpush.bf16.msra.mxu0 %v1433
  %1469 = vmatpush.bf16.msra.mxu0 %v1432
  %1470 = vmatpush.bf16.msra.mxu0 %v1431
  %1471 = vmatpush.bf16.msra.mxu0 %v1430
  %1472 = vmatpush.bf16.msra.mxu0 %v1429
  %1473 = vmatpush.bf16.msra.mxu0 %v1428
  %1474 = vmatmul.bf16.gmra.mxu0 %v1454
  %v1475 = vpop.f32.mrf.mxu0
  %v1476 = vadd.f32 0.0, %v1475
  %v1477 = vpop.f32.mrf.mxu0
  %v1478 = vadd.f32 0.0, %v1477
  %1479 = vmatmul.bf16.gmra.mxu0 %v1456
  %v1480 = vpop.f32.mrf.mxu0
  %v1481 = vadd.f32 0.0, %v1480
  %v1482 = vpop.f32.mrf.mxu0
  %v1483 = vadd.f32 0.0, %v1482
  %1484 = vdwg.mxu0
  %1485 = vmatpush.bf16.msra.mxu0 0
  %1486 = vmatpush.bf16.msra.mxu0 %v1275
  %1487 = vmatpush.bf16.msra.mxu0 %v1441
  %1488 = vmatpush.bf16.msra.mxu0 %v1440
  %1489 = vmatpush.bf16.msra.mxu0 %v1439
  %1490 = vmatpush.bf16.msra.mxu0 %v1438
  %1491 = vmatpush.bf16.msra.mxu0 %v1437
  %1492 = vmatpush.bf16.msra.mxu0 %v1436
  %1493 = vmatmul.bf16.gmra.mxu0 %v1461
  %v1494 = vpop.f32.mrf.mxu0
  %v1495 = vadd.f32 %v1476, %v1494
  %v1496 = vpop.f32.mrf.mxu0
  %v1497 = vadd.f32 %v1478, %v1496
  %1498 = vmatmul.bf16.gmra.mxu0 %v1464
  %v1499 = vpop.f32.mrf.mxu0
  %v1500 = vadd.f32 %v1481, %v1499
  %v1501 = vpop.f32.mrf.mxu0
  %v1502 = vadd.f32 %v1483, %v1501
  %1503 = vdwg.mxu0
  %v1504 = vmax.f32 %v1495, 0.0
  %v1505 = vmax.f32 %v1497, 0.0
  %v1506 = vmax.f32 %v1500, 0.0
  %v1507 = vmax.f32 %v1502, 0.0
  %v1508 = vld [vmem:[%s3] sm:$0xff]
  %v1509 = vld [vmem:[%s3 + $0x8] sm:$0xff]
  %v1510 = vld [vmem:[%s3 + $0x10] sm:$0xff]
  %v1511 = vld [vmem:[%s3 + $0x18] sm:$0xff]
  %v1512 = vpack.c.bf16 %v1509, %v1508
  %v1513 = vpack.c.bf16 %v1511, %v1510
  %s1514 = scalar_lea.vmem %s2, 32
  %v1515 = vld [vmem:[%s1514] sm:$0xf]
  %v1516 = vld [vmem:[%s1514 + $0x4] sm:$0xf]
  %v1517 = vld [vmem:[%s1514 + $0x8] sm:$0xf]
  %v1518 = vld [vmem:[%s1514 + $0xc] sm:$0xf]
  %v1523 = vunpack.c.l.b16 %v1515
  %v1524 = vunpack.c.l.b16 %v1516
  %v1525 = vunpack.c.l.b16 %v1517
  %v1526 = vunpack.c.l.b16 %v1518
  %v1527 = vpack.c.b16 %v1524, %v1523
  %v1528 = vpack.c.b16 %v1526, %v1525
  %1531 = vrot.lane.b32.xlu0 %v1512, 116
  %v1532 = vpop.permute.xlu0 %1531
  %1533 = vrot.lane.b32.xlu0 %v1513, 116
  %v1534 = vpop.permute.xlu0 %1533
  %v1538 = vsel %vm533, %v1527, 0
  %v1541 = vsel %vm533, %v1528, 0
  %1543 = vmatpush.bf16.msra.mxu0 0
  %1544 = vmatpush.bf16.msra.mxu0 0
  %1545 = vmatpush.bf16.msra.mxu0 0
  %1546 = vmatpush.bf16.msra.mxu0 0
  %1547 = vmatpush.bf16.msra.mxu0 0
  %1548 = vmatpush.bf16.msra.mxu0 %v541
  %1549 = vmatpush.bf16.msra.mxu0 %v1534
  %1550 = vmatpush.bf16.msra.mxu0 %v1532
  %1551 = vmatmul.bf16.gmra.mxu0 %v1538
  %v1552 = vpop.f32.mrf.mxu0
  %v1553 = vadd.f32 0.0, %v1552
  %v1554 = vpop.f32.mrf.mxu0
  %v1555 = vadd.f32 0.0, %v1554
  %1556 = vmatmul.bf16.gmra.mxu0 %v1541
  %v1557 = vpop.f32.mrf.mxu0
  %v1558 = vadd.f32 0.0, %v1557
  %v1559 = vpop.f32.mrf.mxu0
  %v1560 = vadd.f32 0.0, %v1559
  %1561 = vdwg.mxu0
  %v1562 = vadd.f32 %v1504, %v1553
  %v1563 = vadd.f32 %v1505, %v1555
  %v1564 = vadd.f32 %v1506, %v1558
  %v1565 = vadd.f32 %v1507, %v1560
  %v1566 = vmax.f32 %v1562, 0.0
  %v1567 = vmax.f32 %v1563, 0.0
  %v1568 = vmax.f32 %v1564, 0.0
  %v1569 = vmax.f32 %v1565, 0.0
  %1574 = vrot.lane.b32.xlu0 %v1566, 12
  %v1575 = vpop.permute.xlu0 %1574
  %1576 = vrot.lane.b32.xlu0 %v1567, 12
  %v1577 = vpop.permute.xlu0 %1576
  %1578 = vrot.lane.b32.xlu0 %v1568, 12
  %v1579 = vpop.permute.xlu0 %1578
  %1580 = vrot.lane.b32.xlu0 %v1569, 12
  %v1581 = vpop.permute.xlu0 %1580
  %1586 = vst.msk [vmem:[%s3] sm:$0xff] %vm272, %v1575
  %1587 = vst.msk [vmem:[%s3 + $0x8] sm:$0xff] %vm272, %v1577
  %1588 = vst.msk [vmem:[%s3 + $0x10] sm:$0xff] %vm272, %v1579
  %1589 = vst.msk [vmem:[%s3 + $0x18] sm:$0xff] %vm272, %v1581
  %1590 = vst.msk [vmem:[%s3] sm:$0xff] %vm277, %v1575
  %1591 = vst.msk [vmem:[%s3 + $0x8] sm:$0xff] %vm277, %v1577
  %1592 = vst.msk [vmem:[%s3 + $0x10] sm:$0xff] %vm277, %v1579
  %1593 = vst.msk [vmem:[%s3 + $0x18] sm:$0xff] %vm277, %v1581
  // Predicated region
  $region14: #{_lambda_.1} parent=0 // pred_check
    _
  $region15: #{_lambda_.1} parent=0 // pred_check_branch
    %1595 = sbr.rel (0) target = $region17
  $region16: #{_lambda_.1} parent=0 // pred_region
    _
  $region17: #{_lambda_.1} parent=0 // pred_fallthru
    _
  // Predicated region
  $region18: #{_lambda_.1} parent=0 // pred_check
    _
  $region19: #{_lambda_.1} parent=0 // pred_check_branch
    %1597 = sbr.rel (0) target = $region21
  $region20: #{_lambda_.1} parent=0 // pred_region
    _
  $region21: #{_lambda_.1} parent=0 // pred_fallthru
    _

</llo_original>
